<compile_context>
chip_gen: v5e
topology: v5e:2x2
jax: 0.10.0
libtpu: 0.0.40
codegen_flags: <defaults>
</compile_context>

<pallas_src>
import functools

import jax
import jax.numpy as jnp
from jax.experimental import pallas as pl
from jax.experimental.pallas import tpu as pltpu

# ---------------------------------------------------------------------------
# Model hyper-parameters (synthetic, small widths; larger batch to exercise
# the batch grid with >= 2 grid steps)
# ---------------------------------------------------------------------------
DIS_INPUT_DIM = 32    # Encodered_dim
DIS_LAYERS    = 2     # dis_layers  (=> 3 Linear layers: D->H, H->H, H->1)
DIS_HIDDEN    = 32    # dis_hidden_dim
HIDDEN_PAD    = 128   # hidden width padded to a full 128-lane MXU tile
BLOCK_B       = 512   # batch rows per grid step (keep bp/BLOCK_B >= 2 for v7x)
BATCH         = 1024  # demo batch (2 grid steps)

NEG_SLOPE = 0.2


def _leaky_relu(x, slope=NEG_SLOPE):
    return jnp.where(x > 0, x, slope * x)


# ---------------------------------------------------------------------------
# Kernel (feature-major: every operand/result is already lane-dense over batch)
# ---------------------------------------------------------------------------
def discriminator_kernel(xT_ref, w1t_ref, b1_ref, w2t_ref, b2_ref, w3_ref,
                         b3_ref, o_ref):
    """One batch tile: 3 bf16 MXU matmuls + bf16 epilogues + f32 sigmoid."""
    xT = xT_ref[...]                                       # (D, BLOCK_B) bf16

    # Layer 0: hT = LeakyReLU(w1T @ xT + b1)    bf16 operands, f32 acc
    h = jnp.dot(w1t_ref[...], xT, preferred_element_type=jnp.float32)
    h = _leaky_relu(h.astype(jnp.bfloat16) + b1_ref[...])  # bf16 (Hp, BLOCK_B)

    # Layer 1: hT = LeakyReLU(w2T @ hT + b2)
    h = jnp.dot(w2t_ref[...], h, preferred_element_type=jnp.float32)
    h = _leaky_relu(h.astype(jnp.bfloat16) + b2_ref[...])  # bf16 (Hp, BLOCK_B)

    # Layer 2: logit = w3_row @ hT + b3  -> lane-dense (1, BLOCK_B)
    logit = jnp.dot(w3_ref[...], h,
                    preferred_element_type=jnp.float32) + b3_ref[...]

    # Numerically stable sigmoid (single tanh EUP push).
    o_ref[...] = 0.5 * (1.0 + jnp.tanh(0.5 * logit))


# ---------------------------------------------------------------------------
# Wrapper
# ---------------------------------------------------------------------------
@functools.partial(jax.jit, static_argnames=("block_b",))
def discriminator_forward(x, packed_params, *, block_b=BLOCK_B):
    """x: (B, DIS_INPUT_DIM) f32 -> (B,) f32 (matches .view(-1))."""
    B, D = x.shape
    assert D == DIS_INPUT_DIM
    w1t, b1t, w2t, b2t, w3r, b3r = packed_params
    hp = w1t.shape[0]

    # Round the batch up to a multiple of the tile (demo uses an exact multiple).
    bp = pl.cdiv(B, block_b) * block_b
    xT = x.astype(jnp.bfloat16).T                          # (D, B) bf16
    if bp != B:
        xT = jnp.pad(xT, ((0, 0), (0, bp - B)))

    grid = (bp // block_b,)

    flops = 2 * bp * (D * hp + hp * hp + hp)
    bytes_accessed = (xT.size * 2                          # x tile stream (bf16)
                      + (w1t.size + w2t.size + w3r.size) * 2
                      + (b1t.size + b2t.size) * 2 + b3r.size * 4
                      + bp * 4)                            # f32 output
    cost = pl.CostEstimate(flops=flops, transcendentals=bp,
                           bytes_accessed=bytes_accessed)

    out = pl.pallas_call(
        discriminator_kernel,
        out_shape=jax.ShapeDtypeStruct((1, bp), jnp.float32),
        grid=grid,
        in_specs=[
            pl.BlockSpec((D, block_b), lambda i: (0, i)),  # xT: streamed per tile
            pl.BlockSpec((hp, D),      lambda i: (0, 0)),  # weights: VMEM-resident
            pl.BlockSpec((hp, 1),      lambda i: (0, 0)),
            pl.BlockSpec((hp, hp),     lambda i: (0, 0)),
            pl.BlockSpec((hp, 1),      lambda i: (0, 0)),
            pl.BlockSpec((1, hp),      lambda i: (0, 0)),
            pl.BlockSpec((1, 1),       lambda i: (0, 0)),
        ],
        out_specs=pl.BlockSpec((1, block_b), lambda i: (0, i)),  # lane-dense out
        compiler_params=pltpu.CompilerParams(
            dimension_semantics=("parallel",),
            vmem_limit_bytes=4 * 1024 * 1024,  # working set < 1 MiB; leave headroom
        ),
        cost_estimate=cost,
    )(xT, w1t, b1t, w2t, b2t, w3r, b3r)

    return out.reshape(-1)[:B]


# ---------------------------------------------------------------------------
# Parameters
# ---------------------------------------------------------------------------
def init_raw_params(key):
    """Unpadded f32 params, nn.Linear-style init, stored as (in_dim, out_dim)."""
    ks = jax.random.split(key, 6)
    s_in = 1.0 / jnp.sqrt(DIS_INPUT_DIM)
    s_h = 1.0 / jnp.sqrt(DIS_HIDDEN)
    w1 = jax.random.uniform(ks[0], (DIS_INPUT_DIM, DIS_HIDDEN), jnp.float32, -s_in, s_in)
    b1 = jax.random.uniform(ks[1], (1, DIS_HIDDEN), jnp.float32, -s_in, s_in)
    w2 = jax.random.uniform(ks[2], (DIS_HIDDEN, DIS_HIDDEN), jnp.float32, -s_h, s_h)
    b2 = jax.random.uniform(ks[3], (1, DIS_HIDDEN), jnp.float32, -s_h, s_h)
    w3 = jax.random.uniform(ks[4], (DIS_HIDDEN, 1), jnp.float32, -s_h, s_h)
    b3 = jax.random.uniform(ks[5], (1, 1), jnp.float32, -s_h, s_h)
    return (w1, b1, w2, b2, w3, b3)


def pack_params(raw, hidden_pad=HIDDEN_PAD):
    """Transpose to feature-major, zero-pad hidden width, cast MXU operands bf16.

    Zero padding keeps the math exactly equivalent to the unpadded model:
    padded activations stay 0 through bias-add (zero-padded bias) and
    LeakyReLU, and padded w2/w3 entries are 0.
    """
    w1, b1, w2, b2, w3, b3 = raw
    pad_h = hidden_pad - w1.shape[1]
    w1t = jnp.pad(w1.T, ((0, pad_h), (0, 0))).astype(jnp.bfloat16)       # (Hp, D)
    b1t = jnp.pad(b1.T, ((0, pad_h), (0, 0))).astype(jnp.bfloat16)       # (Hp, 1)
    w2t = jnp.pad(w2.T, ((0, pad_h), (0, pad_h))).astype(jnp.bfloat16)   # (Hp, Hp)
    b2t = jnp.pad(b2.T, ((0, pad_h), (0, 0))).astype(jnp.bfloat16)       # (Hp, 1)
    w3r = jnp.pad(w3.T, ((0, 0), (0, pad_h))).astype(jnp.bfloat16)       # (1, Hp)
    b3r = b3                                                             # (1, 1) f32
    return (w1t, b1t, w2t, b2t, w3r, b3r)


def reference_forward(x, raw):
    """Pure-JAX reference mirroring the kernel's bf16 operand/epilogue rounding."""
    w1, b1, w2, b2, w3, b3 = raw
    bf = jnp.bfloat16
    xT = x.astype(bf).T
    h = jnp.dot(w1.T.astype(bf), xT, preferred_element_type=jnp.float32)
    h = _leaky_relu(h.astype(bf) + b1.T.astype(bf))
    h = jnp.dot(w2.T.astype(bf), h, preferred_element_type=jnp.float32)
    h = _leaky_relu(h.astype(bf) + b2.T.astype(bf))
    logit = jnp.dot(w3.T.astype(bf), h, preferred_element_type=jnp.float32) + b3
    return (0.5 * (1.0 + jnp.tanh(0.5 * logit))).reshape(-1)


# ---------------------------------------------------------------------------
# Demo / correctness check
# ---------------------------------------------------------------------------
if __name__ == "__main__":
    key = jax.random.PRNGKey(0)
    kx, kp = jax.random.split(key)

    x = jax.random.normal(kx, (BATCH, DIS_INPUT_DIM), dtype=jnp.float32)
    raw_params = init_raw_params(kp)
    packed_params = pack_params(raw_params)

    out = discriminator_forward(x, packed_params)
    out = jax.block_until_ready(out)

    ref = reference_forward(x, raw_params)
    assert out.shape == (BATCH,), out.shape
    # Tolerance covers bf16 MXU operands / bf16 epilogue rounding differences.
    max_err = float(jnp.max(jnp.abs(out - ref)))
    assert max_err < 5e-3, (max_err, out[:8], ref[:8])

    print("KERNEL_OK")
</pallas_src>

<mosaic_0001>
module attributes {stable_mosaic.version = 11 : i64} {
  func.func @discriminator_kernel(%arg0: i32, %arg1: memref<32x512xbf16, #tpu.memory_space<vmem>>, %arg2: memref<128x32xbf16, #tpu.memory_space<vmem>>, %arg3: memref<128x1xbf16, #tpu.memory_space<vmem>>, %arg4: memref<128x128xbf16, #tpu.memory_space<vmem>>, %arg5: memref<128x1xbf16, #tpu.memory_space<vmem>>, %arg6: memref<1x128xbf16, #tpu.memory_space<vmem>>, %arg7: memref<1x1xf32, #tpu.memory_space<vmem>>, %arg8: memref<1x512xf32, #tpu.memory_space<vmem>>) attributes {dimension_semantics = [#tpu.dimension_semantics<parallel>], iteration_bounds = array<i64: 2>, scalar_prefetch = 0 : i64, scratch_operands = 0 : i64, tpu.core_type = #tpu.core_type<tc>, window_params = [{transform_indices = @transform_0, window_bounds = array<i64: 32, 512>}, {pipeline_mode = #tpu.pipeline_mode<synchronous>, transform_indices = @transform_1, window_bounds = array<i64: 128, 32>}, {pipeline_mode = #tpu.pipeline_mode<synchronous>, transform_indices = @transform_2, window_bounds = array<i64: 128, 1>}, {pipeline_mode = #tpu.pipeline_mode<synchronous>, transform_indices = @transform_3, window_bounds = array<i64: 128, 128>}, {pipeline_mode = #tpu.pipeline_mode<synchronous>, transform_indices = @transform_4, window_bounds = array<i64: 128, 1>}, {pipeline_mode = #tpu.pipeline_mode<synchronous>, transform_indices = @transform_5, window_bounds = array<i64: 1, 128>}, {pipeline_mode = #tpu.pipeline_mode<synchronous>, transform_indices = @transform_6, window_bounds = array<i64: 1, 1>}, {transform_indices = @transform_7, window_bounds = array<i64: 1, 512>}]} {
    %c0 = arith.constant 0 : index
    %c0_0 = arith.constant 0 : index
    %0 = vector.load %arg1[%c0, %c0_0] : memref<32x512xbf16, #tpu.memory_space<vmem>>, vector<32x512xbf16>
    %c0_1 = arith.constant 0 : index
    %c0_2 = arith.constant 0 : index
    %1 = vector.load %arg2[%c0_1, %c0_2] : memref<128x32xbf16, #tpu.memory_space<vmem>>, vector<128x32xbf16>
    %cst = arith.constant dense<0.000000e+00> : vector<128x512xf32>
    %2 = tpu.matmul %1, %0, %cst {dimension_numbers = #tpu.dot_dimension_numbers<[1], [0], [0], [1], [0, 0, 1, 1], [], []>} : vector<128x32xbf16>, vector<32x512xbf16>, vector<128x512xf32> -> vector<128x512xf32>
    %3 = arith.truncf %2 : vector<128x512xf32> to vector<128x512xbf16>
    %c0_3 = arith.constant 0 : index
    %c0_4 = arith.constant 0 : index
    %4 = vector.load %arg3[%c0_3, %c0_4] : memref<128x1xbf16, #tpu.memory_space<vmem>>, vector<128x1xbf16>
    %5 = vector.broadcast %4 : vector<128x1xbf16> to vector<128x512xbf16>
    %6 = arith.addf %3, %5 : vector<128x512xbf16>
    %cst_5 = arith.constant 0.000000e+00 : bf16
    %7 = vector.broadcast %cst_5 : bf16 to vector<128x512xbf16>
    %8 = arith.cmpf ogt, %6, %7 : vector<128x512xbf16>
    %cst_6 = arith.constant 2.001950e-01 : bf16
    %9 = vector.broadcast %cst_6 : bf16 to vector<128x512xbf16>
    %10 = arith.mulf %9, %6 : vector<128x512xbf16>
    %11 = arith.select %8, %6, %10 : vector<128x512xi1>, vector<128x512xbf16>
    %c0_7 = arith.constant 0 : index
    %c0_8 = arith.constant 0 : index
    %12 = vector.load %arg4[%c0_7, %c0_8] : memref<128x128xbf16, #tpu.memory_space<vmem>>, vector<128x128xbf16>
    %cst_9 = arith.constant dense<0.000000e+00> : vector<128x512xf32>
    %13 = tpu.matmul %12, %11, %cst_9 {dimension_numbers = #tpu.dot_dimension_numbers<[1], [0], [0], [1], [0, 0, 1, 1], [], []>} : vector<128x128xbf16>, vector<128x512xbf16>, vector<128x512xf32> -> vector<128x512xf32>
    %14 = arith.truncf %13 : vector<128x512xf32> to vector<128x512xbf16>
    %c0_10 = arith.constant 0 : index
    %c0_11 = arith.constant 0 : index
    %15 = vector.load %arg5[%c0_10, %c0_11] : memref<128x1xbf16, #tpu.memory_space<vmem>>, vector<128x1xbf16>
    %16 = vector.broadcast %15 : vector<128x1xbf16> to vector<128x512xbf16>
    %17 = arith.addf %14, %16 : vector<128x512xbf16>
    %cst_12 = arith.constant 0.000000e+00 : bf16
    %18 = vector.broadcast %cst_12 : bf16 to vector<128x512xbf16>
    %19 = arith.cmpf ogt, %17, %18 : vector<128x512xbf16>
    %cst_13 = arith.constant 2.001950e-01 : bf16
    %20 = vector.broadcast %cst_13 : bf16 to vector<128x512xbf16>
    %21 = arith.mulf %20, %17 : vector<128x512xbf16>
    %22 = arith.select %19, %17, %21 : vector<128x512xi1>, vector<128x512xbf16>
    %c0_14 = arith.constant 0 : index
    %c0_15 = arith.constant 0 : index
    %23 = vector.load %arg6[%c0_14, %c0_15] : memref<1x128xbf16, #tpu.memory_space<vmem>>, vector<1x128xbf16>
    %cst_16 = arith.constant dense<0.000000e+00> : vector<1x512xf32>
    %24 = tpu.matmul %23, %22, %cst_16 {dimension_numbers = #tpu.dot_dimension_numbers<[1], [0], [0], [1], [0, 0, 1, 1], [], []>} : vector<1x128xbf16>, vector<128x512xbf16>, vector<1x512xf32> -> vector<1x512xf32>
    %c0_17 = arith.constant 0 : index
    %c0_18 = arith.constant 0 : index
    %25 = vector.load %arg7[%c0_17, %c0_18] : memref<1x1xf32, #tpu.memory_space<vmem>>, vector<1x1xf32>
    %26 = vector.broadcast %25 : vector<1x1xf32> to vector<1x512xf32>
    %27 = arith.addf %24, %26 : vector<1x512xf32>
    %cst_19 = arith.constant 5.000000e-01 : f32
    %28 = vector.broadcast %cst_19 : f32 to vector<1x512xf32>
    %29 = arith.mulf %28, %27 : vector<1x512xf32>
    %30 = math.tanh %29 : vector<1x512xf32>
    %cst_20 = arith.constant 1.000000e+00 : f32
    %31 = vector.broadcast %cst_20 : f32 to vector<1x512xf32>
    %32 = arith.addf %31, %30 : vector<1x512xf32>
    %cst_21 = arith.constant 5.000000e-01 : f32
    %33 = vector.broadcast %cst_21 : f32 to vector<1x512xf32>
    %34 = arith.mulf %33, %32 : vector<1x512xf32>
    %c0_22 = arith.constant 0 : index
    %c0_23 = arith.constant 0 : index
    %35 = vector.load %arg8[%c0_22, %c0_23] : memref<1x512xf32, #tpu.memory_space<vmem>>, vector<1x512xf32>
    tpu.vector_store %arg8[%c0_22, %c0_23], %34 {strides = array<i32>} : memref<1x512xf32, #tpu.memory_space<vmem>>, vector<1x512xf32>,
    return
  }
  func.func @transform_0(%arg0: i32) -> (i32, i32) {
    %c0_i32 = arith.constant 0 : i32
    %c0_i32_0 = arith.constant 0 : i32
    return %c0_i32, %arg0 : i32, i32
  }
  func.func @transform_1(%arg0: i32) -> (i32, i32) {
    %c0_i32 = arith.constant 0 : i32
    %c0_i32_0 = arith.constant 0 : i32
    %c0_i32_1 = arith.constant 0 : i32
    return %c0_i32, %c0_i32_0 : i32, i32
  }
  func.func @transform_2(%arg0: i32) -> (i32, i32) {
    %c0_i32 = arith.constant 0 : i32
    %c0_i32_0 = arith.constant 0 : i32
    %c0_i32_1 = arith.constant 0 : i32
    return %c0_i32, %c0_i32_0 : i32, i32
  }
  func.func @transform_3(%arg0: i32) -> (i32, i32) {
    %c0_i32 = arith.constant 0 : i32
    %c0_i32_0 = arith.constant 0 : i32
    %c0_i32_1 = arith.constant 0 : i32
    return %c0_i32, %c0_i32_0 : i32, i32
  }
  func.func @transform_4(%arg0: i32) -> (i32, i32) {
    %c0_i32 = arith.constant 0 : i32
    %c0_i32_0 = arith.constant 0 : i32
    %c0_i32_1 = arith.constant 0 : i32
    return %c0_i32, %c0_i32_0 : i32, i32
  }
  func.func @transform_5(%arg0: i32) -> (i32, i32) {
    %c0_i32 = arith.constant 0 : i32
    %c0_i32_0 = arith.constant 0 : i32
    %c0_i32_1 = arith.constant 0 : i32
    return %c0_i32, %c0_i32_0 : i32, i32
  }
  func.func @transform_6(%arg0: i32) -> (i32, i32) {
    %c0_i32 = arith.constant 0 : i32
    %c0_i32_0 = arith.constant 0 : i32
    %c0_i32_1 = arith.constant 0 : i32
    return %c0_i32, %c0_i32_0 : i32, i32
  }
  func.func @transform_7(%arg0: i32) -> (i32, i32) {
    %c0_i32 = arith.constant 0 : i32
    %c0_i32_0 = arith.constant 0 : i32
    return %c0_i32, %arg0 : i32, i32
  }
}

</mosaic_0001>

<llo_original>
// kernel: discriminator_forward.1
$region0: #{discriminator_forward.1}
  #allocation0 [shape = 'u32[]', space=smem, size = 0x4, offset = 0x4, fixed_abs, tag = 'smem constant byte address 0x4 - core index']
  #allocation1 [shape = 'u32[72,128]{1,0:T(1,128)}', space=vmem, size = 0x9000, scoped, tag = 'internal scratch']
  #allocation2 [shape = 'f32[1,1]{1,0:T(1,128)S(1)}', space=vmem, size = 0x200, scoped, tag = 'scoped memory for discriminator_forward.1']
  %s0 = inlined_call_operand.vmem [shape: bf16[32,1024], index: 0, kind: input, shape index: {}]
  %s1 = inlined_call_operand.vmem [shape: bf16[128,32], index: 1, kind: input, shape index: {}]
  %s2 = inlined_call_operand.vmem [shape: bf16[128,1], index: 2, kind: input, shape index: {}]
  %s3 = inlined_call_operand.vmem [shape: bf16[128,128], index: 3, kind: input, shape index: {}]
  %s4 = inlined_call_operand.vmem [shape: bf16[128,1], index: 4, kind: input, shape index: {}]
  %s5 = inlined_call_operand.vmem [shape: bf16[1,128], index: 5, kind: input, shape index: {}]
  %s6 = inlined_call_operand.<no memory space> [shape: f32[1,1], index: 6, kind: input, shape index: {}]
  %s7 = inlined_call_operand.hbm [shape: f32[1,1024], index: 7, kind: output, shape index: {}]
  %s8 = sld [smem:[#allocation0]]
  $region84: #{discriminator_forward.1} parent=0
    _
  %s10 = ssub.s32 1, %s8
  %s11 = scalar_select 0, %s10, %s8
  %v12 = vstv %s6
  %13 = vst [vmem:[#allocation2] sm:$0x1] %v12
  $region1: #{discriminator_forward.1} parent=0
    #allocation3 [shape = 'u8[65536]{0}', space=vmem, size = 0x10000, scoped, tag = 'input window, operand 0']
    #allocation4 [shape = 'u8[4096]{0}', space=vmem, size = 0x1000, scoped, tag = 'output window, operand 0']
    #allocation5 [shape = 's32[2]{0}', space=sflag, size = 0x8, scoped, tag = 'scoped memory for discriminator_forward.1']
    %14 = vsyncpa [#allocation5], 0
    %s15 = scalar_lea.sflag [#allocation5], 1
    %16 = vsyncpa %s15, 0
    loop: start=0, step=1, limit=4
    $region2: #{discriminator_forward.1} parent=1 // loop_pre_header
      _
    $region3: #{discriminator_forward.1} parent=1 // loop_header
      %s18 = sphi 0, %s22
      %p19 = scmp.ge.s32.totalorder %s18, 4
      %s28 = sphi 0, %s30
      %s31 = sphi 0, %s28
      %s32 = sphi 0, %s31
      %s48 = sphi 0, %s32
      %s52 = sphi 0, %s52
      %s54 = sphi 0, %s52
      %s55 = sphi 0, %s54
      %s69 = sphi 0, %s55
      %s73 = sphi 0, %s73
      %s75 = sphi 0, %s73
      %s76 = sphi 0, %s75
      %s90 = sphi 0, %s76
      %s94 = sphi 0, %s94
      %s96 = sphi 0, %s94
      %s97 = sphi 0, %s96
      %s111 = sphi 0, %s97
      %s115 = sphi 0, %s115
      %s117 = sphi 0, %s115
      %s118 = sphi 0, %s117
      %s132 = sphi 0, %s118
      %s136 = sphi 0, %s136
      %s138 = sphi 0, %s136
      %s139 = sphi 0, %s138
      %s153 = sphi 0, %s139
      %s157 = sphi 0, %s157
      %s159 = sphi 0, %s157
      %s160 = sphi 0, %s159
      %s174 = sphi 0, %s160
      %s180 = sphi 0, %s182
      %s183 = sphi 0, %s180
      %s184 = sphi 0, %s183
      %s200 = sphi 0, %s184
    $region4: #{discriminator_forward.1} parent=1 // loop_header_branch
      %21 = sbr.rel (%p19) target = $region8
    $region5: #{discriminator_forward.1} parent=1 // loop_body
      %s23 = ssub.s32 %s18, 1
      %s24 = ssub.s32 %s18, 2
      %s25 = sadd.s32 %s18, 1
      %s26 = ssub.s32 %s18, %s25
      %p27 = scmp.eq.s32.totalorder %s26, 0
      %s29 = sadd.s32 %s28, 1
      %s30 = scalar_select %p27, %s28, %s29
      %p33 = pneg %p27
      %p34 = scmp.eq.s32.totalorder %s18, 1
      %p35 = por %p33, %p34
      %p36 = scmp.ne.s32.totalorder %s28, %s31
      %p37 = scmp.eq.s32.totalorder %s18, 0
      %p38 = por %p36, %p37
      %p39 = scmp.ne.s32.totalorder %s28, %s31
      %p40 = scmp.eq.s32.totalorder %s23, 1
      %p41 = por %p39, %p40
      %p42 = scmp.ne.s32.totalorder %s31, %s32
      %p43 = scmp.eq.s32.totalorder %s23, 0
      %p44 = por %p42, %p43
      %p45 = scmp.ne.s32.totalorder %s31, %s32
      %p46 = scmp.eq.s32.totalorder %s24, 1
      %p47 = por %p45, %p46
      %p49 = scmp.ne.s32.totalorder %s32, %s48
      %p50 = scmp.eq.s32.totalorder %s24, 0
      %p51 = por %p49, %p50
      %s53 = sadd.s32 %s52, 1
      %p56 = scmp.eq.s32.totalorder %s18, 1
      %p57 = scmp.ne.s32.totalorder %s52, %s54
      %p58 = scmp.eq.s32.totalorder %s18, 0
      %p59 = por %p57, %p58
      %p60 = scmp.ne.s32.totalorder %s52, %s54
      %p61 = scmp.eq.s32.totalorder %s23, 1
      %p62 = por %p60, %p61
      %p63 = scmp.ne.s32.totalorder %s54, %s55
      %p64 = scmp.eq.s32.totalorder %s23, 0
      %p65 = por %p63, %p64
      %p66 = scmp.ne.s32.totalorder %s54, %s55
      %p67 = scmp.eq.s32.totalorder %s24, 1
      %p68 = por %p66, %p67
      %p70 = scmp.ne.s32.totalorder %s55, %s69
      %p71 = scmp.eq.s32.totalorder %s24, 0
      %p72 = por %p70, %p71
      %s74 = sadd.s32 %s73, 1
      %p77 = scmp.eq.s32.totalorder %s18, 1
      %p78 = scmp.ne.s32.totalorder %s73, %s75
      %p79 = scmp.eq.s32.totalorder %s18, 0
      %p80 = por %p78, %p79
      %p81 = scmp.ne.s32.totalorder %s73, %s75
      %p82 = scmp.eq.s32.totalorder %s23, 1
      %p83 = por %p81, %p82
      %p84 = scmp.ne.s32.totalorder %s75, %s76
      %p85 = scmp.eq.s32.totalorder %s23, 0
      %p86 = por %p84, %p85
      %p87 = scmp.ne.s32.totalorder %s75, %s76
      %p88 = scmp.eq.s32.totalorder %s24, 1
      %p89 = por %p87, %p88
      %p91 = scmp.ne.s32.totalorder %s76, %s90
      %p92 = scmp.eq.s32.totalorder %s24, 0
      %p93 = por %p91, %p92
      %s95 = sadd.s32 %s94, 1
      %p98 = scmp.eq.s32.totalorder %s18, 1
      %p99 = scmp.ne.s32.totalorder %s94, %s96
      %p100 = scmp.eq.s32.totalorder %s18, 0
      %p101 = por %p99, %p100
      %p102 = scmp.ne.s32.totalorder %s94, %s96
      %p103 = scmp.eq.s32.totalorder %s23, 1
      %p104 = por %p102, %p103
      %p105 = scmp.ne.s32.totalorder %s96, %s97
      %p106 = scmp.eq.s32.totalorder %s23, 0
      %p107 = por %p105, %p106
      %p108 = scmp.ne.s32.totalorder %s96, %s97
      %p109 = scmp.eq.s32.totalorder %s24, 1
      %p110 = por %p108, %p109
      %p112 = scmp.ne.s32.totalorder %s97, %s111
      %p113 = scmp.eq.s32.totalorder %s24, 0
      %p114 = por %p112, %p113
      %s116 = sadd.s32 %s115, 1
      %p119 = scmp.eq.s32.totalorder %s18, 1
      %p120 = scmp.ne.s32.totalorder %s115, %s117
      %p121 = scmp.eq.s32.totalorder %s18, 0
      %p122 = por %p120, %p121
      %p123 = scmp.ne.s32.totalorder %s115, %s117
      %p124 = scmp.eq.s32.totalorder %s23, 1
      %p125 = por %p123, %p124
      %p126 = scmp.ne.s32.totalorder %s117, %s118
      %p127 = scmp.eq.s32.totalorder %s23, 0
      %p128 = por %p126, %p127
      %p129 = scmp.ne.s32.totalorder %s117, %s118
      %p130 = scmp.eq.s32.totalorder %s24, 1
      %p131 = por %p129, %p130
      %p133 = scmp.ne.s32.totalorder %s118, %s132
      %p134 = scmp.eq.s32.totalorder %s24, 0
      %p135 = por %p133, %p134
      %s137 = sadd.s32 %s136, 1
      %p140 = scmp.eq.s32.totalorder %s18, 1
      %p141 = scmp.ne.s32.totalorder %s136, %s138
      %p142 = scmp.eq.s32.totalorder %s18, 0
      %p143 = por %p141, %p142
      %p144 = scmp.ne.s32.totalorder %s136, %s138
      %p145 = scmp.eq.s32.totalorder %s23, 1
      %p146 = por %p144, %p145
      %p147 = scmp.ne.s32.totalorder %s138, %s139
      %p148 = scmp.eq.s32.totalorder %s23, 0
      %p149 = por %p147, %p148
      %p150 = scmp.ne.s32.totalorder %s138, %s139
      %p151 = scmp.eq.s32.totalorder %s24, 1
      %p152 = por %p150, %p151
      %p154 = scmp.ne.s32.totalorder %s139, %s153
      %p155 = scmp.eq.s32.totalorder %s24, 0
      %p156 = por %p154, %p155
      %s158 = sadd.s32 %s157, 1
      %p161 = scmp.eq.s32.totalorder %s18, 1
      %p162 = scmp.ne.s32.totalorder %s157, %s159
      %p163 = scmp.eq.s32.totalorder %s18, 0
      %p164 = por %p162, %p163
      %p165 = scmp.ne.s32.totalorder %s157, %s159
      %p166 = scmp.eq.s32.totalorder %s23, 1
      %p167 = por %p165, %p166
      %p168 = scmp.ne.s32.totalorder %s159, %s160
      %p169 = scmp.eq.s32.totalorder %s23, 0
      %p170 = por %p168, %p169
      %p171 = scmp.ne.s32.totalorder %s159, %s160
      %p172 = scmp.eq.s32.totalorder %s24, 1
      %p173 = por %p171, %p172
      %p175 = scmp.ne.s32.totalorder %s160, %s174
      %p176 = scmp.eq.s32.totalorder %s24, 0
      %p177 = por %p175, %p176
      %s178 = ssub.s32 %s18, %s25
      %p179 = scmp.eq.s32.totalorder %s178, 0
      %s181 = sadd.s32 %s180, 1
      %s182 = scalar_select %p179, %s180, %s181
      %p185 = pneg %p179
      %p186 = scmp.eq.s32.totalorder %s18, 1
      %p187 = por %p185, %p186
      %p188 = scmp.ne.s32.totalorder %s180, %s183
      %p189 = scmp.eq.s32.totalorder %s18, 0
      %p190 = por %p188, %p189
      %p191 = scmp.ne.s32.totalorder %s180, %s183
      %p192 = scmp.eq.s32.totalorder %s23, 1
      %p193 = por %p191, %p192
      %p194 = scmp.ne.s32.totalorder %s183, %s184
      %p195 = scmp.eq.s32.totalorder %s23, 0
      %p196 = por %p194, %p195
      %p197 = scmp.ne.s32.totalorder %s183, %s184
      %p198 = scmp.eq.s32.totalorder %s24, 1
      %p199 = por %p197, %p198
      %p201 = scmp.ne.s32.totalorder %s184, %s200
      %p202 = scmp.eq.s32.totalorder %s24, 0
      %p203 = por %p201, %p202
      %p204 = scmp.le.s32.totalorder 1, %s18
      %p205 = scmp.lt.s32.totalorder %s18, 3
      %p206 = pnand %p204, %p205
      %p207 = pneg %p206
      // Predicated region
      $region9: #{discriminator_forward.1} parent=5 // pred_check
        _
      $region10: #{discriminator_forward.1} parent=5 // pred_check_branch
        %209 = sbr.rel (%p206) target = $region12
      $region11: #{discriminator_forward.1} parent=5 // pred_region
        %s210 = ssub.s32 %s18, 1
        // Predicated region
        $region13: #{discriminator_forward.1} parent=11 // pred_check
          %p211 = pneg %p65
        $region14: #{discriminator_forward.1} parent=11 // pred_check_branch
          %213 = sbr.rel (%p211) target = $region16
        $region15: #{discriminator_forward.1} parent=11 // pred_region
          _
        $region16: #{discriminator_forward.1} parent=11 // pred_fallthru
          _
        // Predicated region
        $region17: #{discriminator_forward.1} parent=11 // pred_check
          %p214 = pneg %p86
        $region18: #{discriminator_forward.1} parent=11 // pred_check_branch
          %216 = sbr.rel (%p214) target = $region20
        $region19: #{discriminator_forward.1} parent=11 // pred_region
          _
        $region20: #{discriminator_forward.1} parent=11 // pred_fallthru
          _
        // Predicated region
        $region21: #{discriminator_forward.1} parent=11 // pred_check
          %p217 = pneg %p107
        $region22: #{discriminator_forward.1} parent=11 // pred_check_branch
          %219 = sbr.rel (%p217) target = $region24
        $region23: #{discriminator_forward.1} parent=11 // pred_region
          _
        $region24: #{discriminator_forward.1} parent=11 // pred_fallthru
          _
        // Predicated region
        $region25: #{discriminator_forward.1} parent=11 // pred_check
          %p220 = pneg %p128
        $region26: #{discriminator_forward.1} parent=11 // pred_check_branch
          %222 = sbr.rel (%p220) target = $region28
        $region27: #{discriminator_forward.1} parent=11 // pred_region
          _
        $region28: #{discriminator_forward.1} parent=11 // pred_fallthru
          _
        // Predicated region
        $region29: #{discriminator_forward.1} parent=11 // pred_check
          %p223 = pneg %p149
        $region30: #{discriminator_forward.1} parent=11 // pred_check_branch
          %225 = sbr.rel (%p223) target = $region32
        $region31: #{discriminator_forward.1} parent=11 // pred_region
          _
        $region32: #{discriminator_forward.1} parent=11 // pred_fallthru
          _
        // Predicated region
        $region33: #{discriminator_forward.1} parent=11 // pred_check
          %p226 = pneg %p170
        $region34: #{discriminator_forward.1} parent=11 // pred_check_branch
          %228 = sbr.rel (%p226) target = $region36
        $region35: #{discriminator_forward.1} parent=11 // pred_region
          _
        $region36: #{discriminator_forward.1} parent=11 // pred_fallthru
          _
      $region12: #{discriminator_forward.1} parent=5 // pred_fallthru
        _
      %p229 = scmp.lt.s32.totalorder %s18, 2
      // Predicated region
      $region37: #{discriminator_forward.1} parent=5 // pred_check
        %p230 = pneg %p229
      $region38: #{discriminator_forward.1} parent=5 // pred_check_branch
        %232 = sbr.rel (%p230) target = $region40
      $region39: #{discriminator_forward.1} parent=5 // pred_region
        // Predicated region
        $region41: #{discriminator_forward.1} parent=39 // pred_check
          %p233 = pneg %p38
        $region42: #{discriminator_forward.1} parent=39 // pred_check_branch
          %235 = sbr.rel (%p233) target = $region44
        $region43: #{discriminator_forward.1} parent=39 // pred_region
          %s236 = sand.u32 %s28, 1
          %s237 = sand.u32 %s28, 1
          %s238 = smul.addr %s237, 64
          %s239 = scalar_lea.vmem [#allocation3], %s238
          %s240 = smul.u32 4, %s18
          %s241 = smul.addr %s240, 4
          %s242 = scalar_lea.vmem %s0, %s241
          // Predicated region
          $region45: #{discriminator_forward.1} parent=43 // pred_check
            _
          $region46: #{discriminator_forward.1} parent=43 // pred_check_branch
            %244 = sbr.rel (0) target = $region48
          $region47: #{discriminator_forward.1} parent=43 // pred_region
            // Predicated region
            $region49: #{discriminator_forward.1} parent=47 // pred_check
              _
            $region50: #{discriminator_forward.1} parent=47 // pred_check_branch
              %246 = sbr.rel (0) target = $region52
            $region51: #{discriminator_forward.1} parent=47 // pred_region
              loop: start=0, step=1, limit=1
              $region53: #{discriminator_forward.1} parent=51 // loop_pre_header
                _
              $region54: #{discriminator_forward.1} parent=51 // loop_header
                %s248 = sphi 0, %s252
                %p249 = scmp.ge.s32.totalorder %s248, 1
                %s253 = sphi %s242, %s242
                %s254 = sphi %s239, %s239
              $region55: #{discriminator_forward.1} parent=51 // loop_header_branch
                %251 = sbr.rel (%p249) target = $region59
              $region56: #{discriminator_forward.1} parent=51 // loop_body
                %v255 = vld [vmem:[%s253] sm:$0xff]
                %256 = vst [vmem:[%s254] sm:$0xff] %v255
                %v257 = vld [vmem:[%s253 + $0x8] sm:$0xff]
                %258 = vst [vmem:[%s254 + $0x8] sm:$0xff] %v257
                %v259 = vld [vmem:[%s253 + $0x20] sm:$0xff]
                %260 = vst [vmem:[%s254 + $0x10] sm:$0xff] %v259
                %v261 = vld [vmem:[%s253 + $0x28] sm:$0xff]
                %262 = vst [vmem:[%s254 + $0x18] sm:$0xff] %v261
                %v263 = vld [vmem:[%s253 + $0x40] sm:$0xff]
                %264 = vst [vmem:[%s254 + $0x20] sm:$0xff] %v263
                %v265 = vld [vmem:[%s253 + $0x48] sm:$0xff]
                %266 = vst [vmem:[%s254 + $0x28] sm:$0xff] %v265
                %v267 = vld [vmem:[%s253 + $0x60] sm:$0xff]
                %268 = vst [vmem:[%s254 + $0x30] sm:$0xff] %v267
                %v269 = vld [vmem:[%s253 + $0x68] sm:$0xff]
                %270 = vst [vmem:[%s254 + $0x38] sm:$0xff] %v269
              $region57: #{discriminator_forward.1} parent=51 // loop_footer
                %s252 = sadd.s32 1, %s248
              $region58: #{discriminator_forward.1} parent=51 // loop_footer_branch
                %247 = sbr.rel target = $region54
              $region59: #{discriminator_forward.1} parent=51 // loop_exit
                _
            $region52: #{discriminator_forward.1} parent=47 // pred_fallthru
              _
            // Predicated region
            $region60: #{discriminator_forward.1} parent=47 // pred_check
              _
            $region61: #{discriminator_forward.1} parent=47 // pred_check_branch
              %272 = sbr.rel target = $region63
            $region62: #{discriminator_forward.1} parent=47 // pred_region
              _
            $region63: #{discriminator_forward.1} parent=47 // pred_fallthru
              _
          $region48: #{discriminator_forward.1} parent=43 // pred_fallthru
            _
          %273 = vnop
        $region44: #{discriminator_forward.1} parent=39 // pred_fallthru
          _
      $region40: #{discriminator_forward.1} parent=5 // pred_fallthru
        _
      %p274 = scmp.le.s32.totalorder 1, %s18
      %p275 = scmp.lt.s32.totalorder %s18, 3
      %p276 = pnand %p274, %p275
      %p277 = pneg %p276
      // Predicated region
      $region64: #{discriminator_forward.1} parent=5 // pred_check
        _
      $region65: #{discriminator_forward.1} parent=5 // pred_check_branch
        %279 = sbr.rel (%p276) target = $region67
      $region66: #{discriminator_forward.1} parent=5 // pred_region
        %s280 = ssub.s32 %s18, 1
        %s281 = sand.u32 %s31, 1
        %s282 = sand.u32 %s31, 1
        %s283 = smul.addr %s282, 64
        %s284 = scalar_lea.vmem [#allocation3], %s283
        // Predicated region
        $region68: #{discriminator_forward.1} parent=66 // pred_check
          %p285 = pneg %p44
        $region69: #{discriminator_forward.1} parent=66 // pred_check_branch
          %287 = sbr.rel (%p285) target = $region71
        $region70: #{discriminator_forward.1} parent=66 // pred_region
          _
        $region71: #{discriminator_forward.1} parent=66 // pred_fallthru
          _
        %s288 = sand.u32 %s31, 1
        %s289 = sand.u32 %s31, 1
        %s290 = smul.addr %s289, 64
        %s291 = scalar_lea.vmem [#allocation3], %s290
        %p292 = pneg %p44
        %p293 = pneg %p41
        %p294 = pneg %p65
        %p295 = pneg %p62
        %p296 = pneg %p86
        %p297 = pneg %p83
        %p298 = pneg %p107
        %p299 = pneg %p104
        %p300 = pneg %p128
        %p301 = pneg %p125
        %p302 = pneg %p149
        %p303 = pneg %p146
        %p304 = pneg %p170
        %p305 = pneg %p167
        %p306 = pneg %p196
        %p307 = pneg %p193
        %s308 = sand.u32 %s183, 1
        %s309 = scalar_lea.sflag [#allocation5], %s308
        %s310 = sand.u32 %s183, 1
        %s311 = smul.addr %s310, 4
        %s312 = scalar_lea.vmem [#allocation4], %s311
        %s313 = smul.u32 4, %s23
        %s314 = smul.u32 4, %s23
        %v316 = vld [vmem:[%s284] sm:$0xff]
        %v317 = vld [vmem:[%s284 + $0x8] sm:$0xff]
        %v318 = vld [vmem:[%s284 + $0x10] sm:$0xff]
        %v319 = vld [vmem:[%s284 + $0x18] sm:$0xff]
        %v320 = vld [vmem:[%s284 + $0x20] sm:$0xff]
        %v321 = vld [vmem:[%s284 + $0x28] sm:$0xff]
        %v322 = vld [vmem:[%s284 + $0x30] sm:$0xff]
        %v323 = vld [vmem:[%s284 + $0x38] sm:$0xff]
        %v324 = vld [vmem:[%s1] sm:$0xf]
        %v325 = vld [vmem:[%s1 + $0x4] sm:$0xf]
        %v326 = vld [vmem:[%s1 + $0x8] sm:$0xf]
        %v327 = vld [vmem:[%s1 + $0xc] sm:$0xf]
        %v328 = vld [vmem:[%s1 + $0x10] sm:$0xf]
        %v329 = vld [vmem:[%s1 + $0x14] sm:$0xf]
        %v330 = vld [vmem:[%s1 + $0x18] sm:$0xf]
        %v331 = vld [vmem:[%s1 + $0x1c] sm:$0xf]
        %v332 = vld [vmem:[%s1 + $0x20] sm:$0xf]
        %v333 = vld [vmem:[%s1 + $0x24] sm:$0xf]
        %v334 = vld [vmem:[%s1 + $0x28] sm:$0xf]
        %v335 = vld [vmem:[%s1 + $0x2c] sm:$0xf]
        %v336 = vld [vmem:[%s1 + $0x30] sm:$0xf]
        %v337 = vld [vmem:[%s1 + $0x34] sm:$0xf]
        %v338 = vld [vmem:[%s1 + $0x38] sm:$0xf]
        %v339 = vld [vmem:[%s1 + $0x3c] sm:$0xf]
        %v356 = vunpack.c.l.b16 %v324
        %v357 = vunpack.c.l.b16 %v325
        %v358 = vunpack.c.l.b16 %v326
        %v359 = vunpack.c.l.b16 %v327
        %v360 = vunpack.c.l.b16 %v328
        %v361 = vunpack.c.l.b16 %v329
        %v362 = vunpack.c.l.b16 %v330
        %v363 = vunpack.c.l.b16 %v331
        %v364 = vunpack.c.l.b16 %v332
        %v365 = vunpack.c.l.b16 %v333
        %v366 = vunpack.c.l.b16 %v334
        %v367 = vunpack.c.l.b16 %v335
        %v368 = vunpack.c.l.b16 %v336
        %v369 = vunpack.c.l.b16 %v337
        %v370 = vunpack.c.l.b16 %v338
        %v371 = vunpack.c.l.b16 %v339
        %v372 = vpack.c.b16 %v357, %v356
        %v373 = vpack.c.b16 %v359, %v358
        %v374 = vpack.c.b16 %v361, %v360
        %v375 = vpack.c.b16 %v363, %v362
        %v376 = vpack.c.b16 %v365, %v364
        %v377 = vpack.c.b16 %v367, %v366
        %v378 = vpack.c.b16 %v369, %v368
        %v379 = vpack.c.b16 %v371, %v370
        %v388 = vunpack.c.l.b16 %v316
        %v389 = vunpack.c.h.b16 %v316
        %v390 = vunpack.c.l.b16 %v317
        %v391 = vunpack.c.h.b16 %v317
        %v392 = vunpack.c.l.b16 %v318
        %v393 = vunpack.c.h.b16 %v318
        %v394 = vunpack.c.l.b16 %v319
        %v395 = vunpack.c.h.b16 %v319
        %v396 = vunpack.c.l.b16 %v320
        %v397 = vunpack.c.h.b16 %v320
        %v398 = vunpack.c.l.b16 %v321
        %v399 = vunpack.c.h.b16 %v321
        %v400 = vunpack.c.l.b16 %v322
        %v401 = vunpack.c.h.b16 %v322
        %v402 = vunpack.c.l.b16 %v323
        %v403 = vunpack.c.h.b16 %v323
        %v404 = vpack.c.b16 %v392, %v388
        %v405 = vpack.c.b16 %v393, %v389
        %v406 = vpack.c.b16 %v394, %v390
        %v407 = vpack.c.b16 %v395, %v391
        %v408 = vpack.c.b16 %v400, %v396
        %v409 = vpack.c.b16 %v401, %v397
        %v410 = vpack.c.b16 %v402, %v398
        %v411 = vpack.c.b16 %v403, %v399
        %vm420 = vcmask 261120
        %v422 = vsel %vm420, %v372, 0
        %v425 = vsel %vm420, %v373, 0
        %v428 = vsel %vm420, %v374, 0
        %v431 = vsel %vm420, %v375, 0
        %v434 = vsel %vm420, %v376, 0
        %v437 = vsel %vm420, %v377, 0
        %v440 = vsel %vm420, %v378, 0
        %v443 = vsel %vm420, %v379, 0
        %445 = vmatpush.bf16.msra.mxu0 0
        %446 = vmatpush.bf16.msra.mxu0 0
        %447 = vmatpush.bf16.msra.mxu0 0
        %448 = vmatpush.bf16.msra.mxu0 0
        %449 = vmatpush.bf16.msra.mxu0 0
        %450 = vmatpush.bf16.msra.mxu0 0
        %451 = vmatpush.bf16.msra.mxu0 %v408
        %452 = vmatpush.bf16.msra.mxu0 %v404
        %453 = vmatmul.bf16.gmra.mxu0 %v422
        %v454 = vpop.f32.mrf.mxu0
        %v455 = vadd.f32 0.0, %v454
        %v456 = vpop.f32.mrf.mxu0
        %v457 = vadd.f32 0.0, %v456
        %458 = vmatmul.bf16.gmra.mxu0 %v425
        %v459 = vpop.f32.mrf.mxu0
        %v460 = vadd.f32 0.0, %v459
        %v461 = vpop.f32.mrf.mxu0
        %v462 = vadd.f32 0.0, %v461
        %463 = vmatmul.bf16.gmra.mxu0 %v428
        %v464 = vpop.f32.mrf.mxu0
        %v465 = vadd.f32 0.0, %v464
        %v466 = vpop.f32.mrf.mxu0
        %v467 = vadd.f32 0.0, %v466
        %468 = vmatmul.bf16.gmra.mxu0 %v431
        %v469 = vpop.f32.mrf.mxu0
        %v470 = vadd.f32 0.0, %v469
        %v471 = vpop.f32.mrf.mxu0
        %v472 = vadd.f32 0.0, %v471
        %473 = vmatmul.bf16.gmra.mxu0 %v434
        %v474 = vpop.f32.mrf.mxu0
        %v475 = vadd.f32 0.0, %v474
        %v476 = vpop.f32.mrf.mxu0
        %v477 = vadd.f32 0.0, %v476
        %478 = vmatmul.bf16.gmra.mxu0 %v437
        %v479 = vpop.f32.mrf.mxu0
        %v480 = vadd.f32 0.0, %v479
        %v481 = vpop.f32.mrf.mxu0
        %v482 = vadd.f32 0.0, %v481
        %483 = vmatmul.bf16.gmra.mxu0 %v440
        %v484 = vpop.f32.mrf.mxu0
        %v485 = vadd.f32 0.0, %v484
        %v486 = vpop.f32.mrf.mxu0
        %v487 = vadd.f32 0.0, %v486
        %488 = vmatmul.bf16.gmra.mxu0 %v443
        %v489 = vpop.f32.mrf.mxu0
        %v490 = vadd.f32 0.0, %v489
        %v491 = vpop.f32.mrf.mxu0
        %v492 = vadd.f32 0.0, %v491
        %493 = vdwg.mxu0
        %494 = vmatpush.bf16.msra.mxu0 0
        %495 = vmatpush.bf16.msra.mxu0 0
        %496 = vmatpush.bf16.msra.mxu0 0
        %497 = vmatpush.bf16.msra.mxu0 0
        %498 = vmatpush.bf16.msra.mxu0 0
        %499 = vmatpush.bf16.msra.mxu0 0
        %500 = vmatpush.bf16.msra.mxu0 %v409
        %501 = vmatpush.bf16.msra.mxu0 %v405
        %502 = vmatmul.bf16.gmra.mxu0 %v422
        %v503 = vpop.f32.mrf.mxu0
        %v504 = vadd.f32 0.0, %v503
        %v505 = vpop.f32.mrf.mxu0
        %v506 = vadd.f32 0.0, %v505
        %507 = vmatmul.bf16.gmra.mxu0 %v425
        %v508 = vpop.f32.mrf.mxu0
        %v509 = vadd.f32 0.0, %v508
        %v510 = vpop.f32.mrf.mxu0
        %v511 = vadd.f32 0.0, %v510
        %512 = vmatmul.bf16.gmra.mxu0 %v428
        %v513 = vpop.f32.mrf.mxu0
        %v514 = vadd.f32 0.0, %v513
        %v515 = vpop.f32.mrf.mxu0
        %v516 = vadd.f32 0.0, %v515
        %517 = vmatmul.bf16.gmra.mxu0 %v431
        %v518 = vpop.f32.mrf.mxu0
        %v519 = vadd.f32 0.0, %v518
        %v520 = vpop.f32.mrf.mxu0
        %v521 = vadd.f32 0.0, %v520
        %522 = vmatmul.bf16.gmra.mxu0 %v434
        %v523 = vpop.f32.mrf.mxu0
        %v524 = vadd.f32 0.0, %v523
        %v525 = vpop.f32.mrf.mxu0
        %v526 = vadd.f32 0.0, %v525
        %527 = vmatmul.bf16.gmra.mxu0 %v437
        %v528 = vpop.f32.mrf.mxu0
        %v529 = vadd.f32 0.0, %v528
        %v530 = vpop.f32.mrf.mxu0
        %v531 = vadd.f32 0.0, %v530
        %532 = vmatmul.bf16.gmra.mxu0 %v440
        %v533 = vpop.f32.mrf.mxu0
        %v534 = vadd.f32 0.0, %v533
        %v535 = vpop.f32.mrf.mxu0
        %v536 = vadd.f32 0.0, %v535
        %537 = vmatmul.bf16.gmra.mxu0 %v443
        %v538 = vpop.f32.mrf.mxu0
        %v539 = vadd.f32 0.0, %v538
        %v540 = vpop.f32.mrf.mxu0
        %v541 = vadd.f32 0.0, %v540
        %542 = vdwg.mxu0
        %543 = vmatpush.bf16.msra.mxu0 0
        %544 = vmatpush.bf16.msra.mxu0 0
        %545 = vmatpush.bf16.msra.mxu0 0
        %546 = vmatpush.bf16.msra.mxu0 0
        %547 = vmatpush.bf16.msra.mxu0 0
        %548 = vmatpush.bf16.msra.mxu0 0
        %549 = vmatpush.bf16.msra.mxu0 %v410
        %550 = vmatpush.bf16.msra.mxu0 %v406
        %551 = vmatmul.bf16.gmra.mxu0 %v422
        %v552 = vpop.f32.mrf.mxu0
        %v553 = vadd.f32 0.0, %v552
        %v554 = vpop.f32.mrf.mxu0
        %v555 = vadd.f32 0.0, %v554
        %556 = vmatmul.bf16.gmra.mxu0 %v425
        %v557 = vpop.f32.mrf.mxu0
        %v558 = vadd.f32 0.0, %v557
        %v559 = vpop.f32.mrf.mxu0
        %v560 = vadd.f32 0.0, %v559
        %561 = vmatmul.bf16.gmra.mxu0 %v428
        %v562 = vpop.f32.mrf.mxu0
        %v563 = vadd.f32 0.0, %v562
        %v564 = vpop.f32.mrf.mxu0
        %v565 = vadd.f32 0.0, %v564
        %566 = vmatmul.bf16.gmra.mxu0 %v431
        %v567 = vpop.f32.mrf.mxu0
        %v568 = vadd.f32 0.0, %v567
        %v569 = vpop.f32.mrf.mxu0
        %v570 = vadd.f32 0.0, %v569
        %571 = vmatmul.bf16.gmra.mxu0 %v434
        %v572 = vpop.f32.mrf.mxu0
        %v573 = vadd.f32 0.0, %v572
        %v574 = vpop.f32.mrf.mxu0
        %v575 = vadd.f32 0.0, %v574
        %576 = vmatmul.bf16.gmra.mxu0 %v437
        %v577 = vpop.f32.mrf.mxu0
        %v578 = vadd.f32 0.0, %v577
        %v579 = vpop.f32.mrf.mxu0
        %v580 = vadd.f32 0.0, %v579
        %581 = vmatmul.bf16.gmra.mxu0 %v440
        %v582 = vpop.f32.mrf.mxu0
        %v583 = vadd.f32 0.0, %v582
        %v584 = vpop.f32.mrf.mxu0
        %v585 = vadd.f32 0.0, %v584
        %586 = vmatmul.bf16.gmra.mxu0 %v443
        %v587 = vpop.f32.mrf.mxu0
        %v588 = vadd.f32 0.0, %v587
        %v589 = vpop.f32.mrf.mxu0
        %v590 = vadd.f32 0.0, %v589
        %591 = vdwg.mxu0
        %592 = vmatpush.bf16.msra.mxu0 0
        %593 = vmatpush.bf16.msra.mxu0 0
        %594 = vmatpush.bf16.msra.mxu0 0
        %595 = vmatpush.bf16.msra.mxu0 0
        %596 = vmatpush.bf16.msra.mxu0 0
        %597 = vmatpush.bf16.msra.mxu0 0
        %598 = vmatpush.bf16.msra.mxu0 %v411
        %599 = vmatpush.bf16.msra.mxu0 %v407
        %600 = vmatmul.bf16.gmra.mxu0 %v422
        %v601 = vpop.f32.mrf.mxu0
        %v602 = vadd.f32 0.0, %v601
        %v603 = vpop.f32.mrf.mxu0
        %v604 = vadd.f32 0.0, %v603
        %605 = vmatmul.bf16.gmra.mxu0 %v425
        %v606 = vpop.f32.mrf.mxu0
        %v607 = vadd.f32 0.0, %v606
        %v608 = vpop.f32.mrf.mxu0
        %v609 = vadd.f32 0.0, %v608
        %610 = vmatmul.bf16.gmra.mxu0 %v428
        %v611 = vpop.f32.mrf.mxu0
        %v612 = vadd.f32 0.0, %v611
        %v613 = vpop.f32.mrf.mxu0
        %v614 = vadd.f32 0.0, %v613
        %615 = vmatmul.bf16.gmra.mxu0 %v431
        %v616 = vpop.f32.mrf.mxu0
        %v617 = vadd.f32 0.0, %v616
        %v618 = vpop.f32.mrf.mxu0
        %v619 = vadd.f32 0.0, %v618
        %620 = vmatmul.bf16.gmra.mxu0 %v434
        %v621 = vpop.f32.mrf.mxu0
        %v622 = vadd.f32 0.0, %v621
        %v623 = vpop.f32.mrf.mxu0
        %v624 = vadd.f32 0.0, %v623
        %625 = vmatmul.bf16.gmra.mxu0 %v437
        %v626 = vpop.f32.mrf.mxu0
        %v627 = vadd.f32 0.0, %v626
        %v628 = vpop.f32.mrf.mxu0
        %v629 = vadd.f32 0.0, %v628
        %630 = vmatmul.bf16.gmra.mxu0 %v440
        %v631 = vpop.f32.mrf.mxu0
        %v632 = vadd.f32 0.0, %v631
        %v633 = vpop.f32.mrf.mxu0
        %v634 = vadd.f32 0.0, %v633
        %635 = vmatmul.bf16.gmra.mxu0 %v443
        %v636 = vpop.f32.mrf.mxu0
        %v637 = vadd.f32 0.0, %v636
        %v638 = vpop.f32.mrf.mxu0
        %v639 = vadd.f32 0.0, %v638
        %640 = vdwg.mxu0
        %v641 = vpack.c.bf16 %v504, %v455
        %v642 = vpack.c.bf16 %v602, %v553
        %v643 = vpack.c.bf16 %v506, %v457
        %v644 = vpack.c.bf16 %v604, %v555
        %v645 = vpack.c.bf16 %v509, %v460
        %v646 = vpack.c.bf16 %v607, %v558
        %v647 = vpack.c.bf16 %v511, %v462
        %v648 = vpack.c.bf16 %v609, %v560
        %v649 = vpack.c.bf16 %v514, %v465
        %v650 = vpack.c.bf16 %v612, %v563
        %v651 = vpack.c.bf16 %v516, %v467
        %v652 = vpack.c.bf16 %v614, %v565
        %v653 = vpack.c.bf16 %v519, %v470
        %v654 = vpack.c.bf16 %v617, %v568
        %v655 = vpack.c.bf16 %v521, %v472
        %v656 = vpack.c.bf16 %v619, %v570
        %v657 = vpack.c.bf16 %v524, %v475
        %v658 = vpack.c.bf16 %v622, %v573
        %v659 = vpack.c.bf16 %v526, %v477
        %v660 = vpack.c.bf16 %v624, %v575
        %v661 = vpack.c.bf16 %v529, %v480
        %v662 = vpack.c.bf16 %v627, %v578
        %v663 = vpack.c.bf16 %v531, %v482
        %v664 = vpack.c.bf16 %v629, %v580
        %v665 = vpack.c.bf16 %v534, %v485
        %v666 = vpack.c.bf16 %v632, %v583
        %v667 = vpack.c.bf16 %v536, %v487
        %v668 = vpack.c.bf16 %v634, %v585
        %v669 = vpack.c.bf16 %v539, %v490
        %v670 = vpack.c.bf16 %v637, %v588
        %v671 = vpack.c.bf16 %v541, %v492
        %v672 = vpack.c.bf16 %v639, %v590
        %v673 = vld [vmem:[%s2] sm:$0xf]
        %v674 = vld [vmem:[%s2 + $0x4] sm:$0xf]
        %v675 = vld [vmem:[%s2 + $0x8] sm:$0xf]
        %v676 = vld [vmem:[%s2 + $0xc] sm:$0xf]
        %v677 = vld [vmem:[%s2 + $0x10] sm:$0xf]
        %v678 = vld [vmem:[%s2 + $0x14] sm:$0xf]
        %v679 = vld [vmem:[%s2 + $0x18] sm:$0xf]
        %v680 = vld [vmem:[%s2 + $0x1c] sm:$0xf]
        %v681 = vld [vmem:[%s2 + $0x20] sm:$0xf]
        %v682 = vld [vmem:[%s2 + $0x24] sm:$0xf]
        %v683 = vld [vmem:[%s2 + $0x28] sm:$0xf]
        %v684 = vld [vmem:[%s2 + $0x2c] sm:$0xf]
        %v685 = vld [vmem:[%s2 + $0x30] sm:$0xf]
        %v686 = vld [vmem:[%s2 + $0x34] sm:$0xf]
        %v687 = vld [vmem:[%s2 + $0x38] sm:$0xf]
        %v688 = vld [vmem:[%s2 + $0x3c] sm:$0xf]
        %690 = vset.pattern.permute.xlu0 0
        %691 = vperm.xlu0 %690, %v673
        %v692 = vpop.permute.xlu0 %691
        %v695 = vunpack.c.l.s4 839922192
        %v696 = vunpack.c.0.s8 %v695
        %v697 = vperm.slane %v692, %v696
        %699 = vset.pattern.permute.xlu0 0
        %700 = vperm.xlu0 %699, %v674
        %v701 = vpop.permute.xlu0 %700
        %v704 = vunpack.c.l.s4 839922192
        %v705 = vunpack.c.0.s8 %v704
        %v706 = vperm.slane %v701, %v705
        %708 = vset.pattern.permute.xlu0 0
        %709 = vperm.xlu0 %708, %v675
        %v710 = vpop.permute.xlu0 %709
        %v713 = vunpack.c.l.s4 839922192
        %v714 = vunpack.c.0.s8 %v713
        %v715 = vperm.slane %v710, %v714
        %717 = vset.pattern.permute.xlu0 0
        %718 = vperm.xlu0 %717, %v676
        %v719 = vpop.permute.xlu0 %718
        %v722 = vunpack.c.l.s4 839922192
        %v723 = vunpack.c.0.s8 %v722
        %v724 = vperm.slane %v719, %v723
        %726 = vset.pattern.permute.xlu0 0
        %727 = vperm.xlu0 %726, %v677
        %v728 = vpop.permute.xlu0 %727
        %v731 = vunpack.c.l.s4 839922192
        %v732 = vunpack.c.0.s8 %v731
        %v733 = vperm.slane %v728, %v732
        %735 = vset.pattern.permute.xlu0 0
        %736 = vperm.xlu0 %735, %v678
        %v737 = vpop.permute.xlu0 %736
        %v740 = vunpack.c.l.s4 839922192
        %v741 = vunpack.c.0.s8 %v740
        %v742 = vperm.slane %v737, %v741
        %744 = vset.pattern.permute.xlu0 0
        %745 = vperm.xlu0 %744, %v679
        %v746 = vpop.permute.xlu0 %745
        %v749 = vunpack.c.l.s4 839922192
        %v750 = vunpack.c.0.s8 %v749
        %v751 = vperm.slane %v746, %v750
        %753 = vset.pattern.permute.xlu0 0
        %754 = vperm.xlu0 %753, %v680
        %v755 = vpop.permute.xlu0 %754
        %v758 = vunpack.c.l.s4 839922192
        %v759 = vunpack.c.0.s8 %v758
        %v760 = vperm.slane %v755, %v759
        %762 = vset.pattern.permute.xlu0 0
        %763 = vperm.xlu0 %762, %v681
        %v764 = vpop.permute.xlu0 %763
        %v767 = vunpack.c.l.s4 839922192
        %v768 = vunpack.c.0.s8 %v767
        %v769 = vperm.slane %v764, %v768
        %771 = vset.pattern.permute.xlu0 0
        %772 = vperm.xlu0 %771, %v682
        %v773 = vpop.permute.xlu0 %772
        %v776 = vunpack.c.l.s4 839922192
        %v777 = vunpack.c.0.s8 %v776
        %v778 = vperm.slane %v773, %v777
        %780 = vset.pattern.permute.xlu0 0
        %781 = vperm.xlu0 %780, %v683
        %v782 = vpop.permute.xlu0 %781
        %v785 = vunpack.c.l.s4 839922192
        %v786 = vunpack.c.0.s8 %v785
        %v787 = vperm.slane %v782, %v786
        %789 = vset.pattern.permute.xlu0 0
        %790 = vperm.xlu0 %789, %v684
        %v791 = vpop.permute.xlu0 %790
        %v794 = vunpack.c.l.s4 839922192
        %v795 = vunpack.c.0.s8 %v794
        %v796 = vperm.slane %v791, %v795
        %798 = vset.pattern.permute.xlu0 0
        %799 = vperm.xlu0 %798, %v685
        %v800 = vpop.permute.xlu0 %799
        %v803 = vunpack.c.l.s4 839922192
        %v804 = vunpack.c.0.s8 %v803
        %v805 = vperm.slane %v800, %v804
        %807 = vset.pattern.permute.xlu0 0
        %808 = vperm.xlu0 %807, %v686
        %v809 = vpop.permute.xlu0 %808
        %v812 = vunpack.c.l.s4 839922192
        %v813 = vunpack.c.0.s8 %v812
        %v814 = vperm.slane %v809, %v813
        %816 = vset.pattern.permute.xlu0 0
        %817 = vperm.xlu0 %816, %v687
        %v818 = vpop.permute.xlu0 %817
        %v821 = vunpack.c.l.s4 839922192
        %v822 = vunpack.c.0.s8 %v821
        %v823 = vperm.slane %v818, %v822
        %825 = vset.pattern.permute.xlu0 0
        %826 = vperm.xlu0 %825, %v688
        %v827 = vpop.permute.xlu0 %826
        %v830 = vunpack.c.l.s4 839922192
        %v831 = vunpack.c.0.s8 %v830
        %v832 = vperm.slane %v827, %v831
        %v833 = vunpack.c.l.bf16 %v641
        %v834 = vunpack.c.h.bf16 %v641
        %v835 = vunpack.c.l.bf16 %v642
        %v836 = vunpack.c.h.bf16 %v642
        %v837 = vunpack.c.l.bf16 %v643
        %v838 = vunpack.c.h.bf16 %v643
        %v839 = vunpack.c.l.bf16 %v644
        %v840 = vunpack.c.h.bf16 %v644
        %v841 = vunpack.c.l.bf16 %v645
        %v842 = vunpack.c.h.bf16 %v645
        %v843 = vunpack.c.l.bf16 %v646
        %v844 = vunpack.c.h.bf16 %v646
        %v845 = vunpack.c.l.bf16 %v647
        %v846 = vunpack.c.h.bf16 %v647
        %v847 = vunpack.c.l.bf16 %v648
        %v848 = vunpack.c.h.bf16 %v648
        %v849 = vunpack.c.l.bf16 %v649
        %v850 = vunpack.c.h.bf16 %v649
        %v851 = vunpack.c.l.bf16 %v650
        %v852 = vunpack.c.h.bf16 %v650
        %v853 = vunpack.c.l.bf16 %v651
        %v854 = vunpack.c.h.bf16 %v651
        %v855 = vunpack.c.l.bf16 %v652
        %v856 = vunpack.c.h.bf16 %v652
        %v857 = vunpack.c.l.bf16 %v653
        %v858 = vunpack.c.h.bf16 %v653
        %v859 = vunpack.c.l.bf16 %v654
        %v860 = vunpack.c.h.bf16 %v654
        %v861 = vunpack.c.l.bf16 %v655
        %v862 = vunpack.c.h.bf16 %v655
        %v863 = vunpack.c.l.bf16 %v656
        %v864 = vunpack.c.h.bf16 %v656
        %v865 = vunpack.c.l.bf16 %v657
        %v866 = vunpack.c.h.bf16 %v657
        %v867 = vunpack.c.l.bf16 %v658
        %v868 = vunpack.c.h.bf16 %v658
        %v869 = vunpack.c.l.bf16 %v659
        %v870 = vunpack.c.h.bf16 %v659
        %v871 = vunpack.c.l.bf16 %v660
        %v872 = vunpack.c.h.bf16 %v660
        %v873 = vunpack.c.l.bf16 %v661
        %v874 = vunpack.c.h.bf16 %v661
        %v875 = vunpack.c.l.bf16 %v662
        %v876 = vunpack.c.h.bf16 %v662
        %v877 = vunpack.c.l.bf16 %v663
        %v878 = vunpack.c.h.bf16 %v663
        %v879 = vunpack.c.l.bf16 %v664
        %v880 = vunpack.c.h.bf16 %v664
        %v881 = vunpack.c.l.bf16 %v665
        %v882 = vunpack.c.h.bf16 %v665
        %v883 = vunpack.c.l.bf16 %v666
        %v884 = vunpack.c.h.bf16 %v666
        %v885 = vunpack.c.l.bf16 %v667
        %v886 = vunpack.c.h.bf16 %v667
        %v887 = vunpack.c.l.bf16 %v668
        %v888 = vunpack.c.h.bf16 %v668
        %v889 = vunpack.c.l.bf16 %v669
        %v890 = vunpack.c.h.bf16 %v669
        %v891 = vunpack.c.l.bf16 %v670
        %v892 = vunpack.c.h.bf16 %v670
        %v893 = vunpack.c.l.bf16 %v671
        %v894 = vunpack.c.h.bf16 %v671
        %v895 = vunpack.c.l.bf16 %v672
        %v896 = vunpack.c.h.bf16 %v672
        %v897 = vunpack.c.l.bf16 %v697
        %v898 = vunpack.c.l.bf16 %v706
        %v899 = vunpack.c.l.bf16 %v715
        %v900 = vunpack.c.l.bf16 %v724
        %v901 = vunpack.c.l.bf16 %v733
        %v902 = vunpack.c.l.bf16 %v742
        %v903 = vunpack.c.l.bf16 %v751
        %v904 = vunpack.c.l.bf16 %v760
        %v905 = vunpack.c.l.bf16 %v769
        %v906 = vunpack.c.l.bf16 %v778
        %v907 = vunpack.c.l.bf16 %v787
        %v908 = vunpack.c.l.bf16 %v796
        %v909 = vunpack.c.l.bf16 %v805
        %v910 = vunpack.c.l.bf16 %v814
        %v911 = vunpack.c.l.bf16 %v823
        %v912 = vunpack.c.l.bf16 %v832
        %v913 = vadd.f32 %v833, %v897
        %v914 = vadd.f32 %v834, %v897
        %v915 = vadd.f32 %v835, %v897
        %v916 = vadd.f32 %v836, %v897
        %v917 = vadd.f32 %v837, %v898
        %v918 = vadd.f32 %v838, %v898
        %v919 = vadd.f32 %v839, %v898
        %v920 = vadd.f32 %v840, %v898
        %v921 = vadd.f32 %v841, %v899
        %v922 = vadd.f32 %v842, %v899
        %v923 = vadd.f32 %v843, %v899
        %v924 = vadd.f32 %v844, %v899
        %v925 = vadd.f32 %v845, %v900
        %v926 = vadd.f32 %v846, %v900
        %v927 = vadd.f32 %v847, %v900
        %v928 = vadd.f32 %v848, %v900
        %v929 = vadd.f32 %v849, %v901
        %v930 = vadd.f32 %v850, %v901
        %v931 = vadd.f32 %v851, %v901
        %v932 = vadd.f32 %v852, %v901
        %v933 = vadd.f32 %v853, %v902
        %v934 = vadd.f32 %v854, %v902
        %v935 = vadd.f32 %v855, %v902
        %v936 = vadd.f32 %v856, %v902
        %v937 = vadd.f32 %v857, %v903
        %v938 = vadd.f32 %v858, %v903
        %v939 = vadd.f32 %v859, %v903
        %v940 = vadd.f32 %v860, %v903
        %v941 = vadd.f32 %v861, %v904
        %v942 = vadd.f32 %v862, %v904
        %v943 = vadd.f32 %v863, %v904
        %v944 = vadd.f32 %v864, %v904
        %v945 = vadd.f32 %v865, %v905
        %v946 = vadd.f32 %v866, %v905
        %v947 = vadd.f32 %v867, %v905
        %v948 = vadd.f32 %v868, %v905
        %v949 = vadd.f32 %v869, %v906
        %v950 = vadd.f32 %v870, %v906
        %v951 = vadd.f32 %v871, %v906
        %v952 = vadd.f32 %v872, %v906
        %v953 = vadd.f32 %v873, %v907
        %v954 = vadd.f32 %v874, %v907
        %v955 = vadd.f32 %v875, %v907
        %v956 = vadd.f32 %v876, %v907
        %v957 = vadd.f32 %v877, %v908
        %v958 = vadd.f32 %v878, %v908
        %v959 = vadd.f32 %v879, %v908
        %v960 = vadd.f32 %v880, %v908
        %v961 = vadd.f32 %v881, %v909
        %v962 = vadd.f32 %v882, %v909
        %v963 = vadd.f32 %v883, %v909
        %v964 = vadd.f32 %v884, %v909
        %v965 = vadd.f32 %v885, %v910
        %v966 = vadd.f32 %v886, %v910
        %v967 = vadd.f32 %v887, %v910
        %v968 = vadd.f32 %v888, %v910
        %v969 = vadd.f32 %v889, %v911
        %v970 = vadd.f32 %v890, %v911
        %v971 = vadd.f32 %v891, %v911
        %v972 = vadd.f32 %v892, %v911
        %v973 = vadd.f32 %v893, %v912
        %v974 = vadd.f32 %v894, %v912
        %v975 = vadd.f32 %v895, %v912
        %v976 = vadd.f32 %v896, %v912
        %v977 = vpack.c.bf16 %v914, %v913
        %v978 = vpack.c.bf16 %v916, %v915
        %v979 = vpack.c.bf16 %v918, %v917
        %v980 = vpack.c.bf16 %v920, %v919
        %v981 = vpack.c.bf16 %v922, %v921
        %v982 = vpack.c.bf16 %v924, %v923
        %v983 = vpack.c.bf16 %v926, %v925
        %v984 = vpack.c.bf16 %v928, %v927
        %v985 = vpack.c.bf16 %v930, %v929
        %v986 = vpack.c.bf16 %v932, %v931
        %v987 = vpack.c.bf16 %v934, %v933
        %v988 = vpack.c.bf16 %v936, %v935
        %v989 = vpack.c.bf16 %v938, %v937
        %v990 = vpack.c.bf16 %v940, %v939
        %v991 = vpack.c.bf16 %v942, %v941
        %v992 = vpack.c.bf16 %v944, %v943
        %v993 = vpack.c.bf16 %v946, %v945
        %v994 = vpack.c.bf16 %v948, %v947
        %v995 = vpack.c.bf16 %v950, %v949
        %v996 = vpack.c.bf16 %v952, %v951
        %v997 = vpack.c.bf16 %v954, %v953
        %v998 = vpack.c.bf16 %v956, %v955
        %v999 = vpack.c.bf16 %v958, %v957
        %v1000 = vpack.c.bf16 %v960, %v959
        %v1001 = vpack.c.bf16 %v962, %v961
        %v1002 = vpack.c.bf16 %v964, %v963
        %v1003 = vpack.c.bf16 %v966, %v965
        %v1004 = vpack.c.bf16 %v968, %v967
        %v1005 = vpack.c.bf16 %v970, %v969
        %v1006 = vpack.c.bf16 %v972, %v971
        %v1007 = vpack.c.bf16 %v974, %v973
        %v1008 = vpack.c.bf16 %v976, %v975
        %v1009 = vunpack.c.l.bf16 %v977
        %v1010 = vunpack.c.h.bf16 %v977
        %v1011 = vunpack.c.l.bf16 %v978
        %v1012 = vunpack.c.h.bf16 %v978
        %v1013 = vunpack.c.l.bf16 %v979
        %v1014 = vunpack.c.h.bf16 %v979
        %v1015 = vunpack.c.l.bf16 %v980
        %v1016 = vunpack.c.h.bf16 %v980
        %v1017 = vunpack.c.l.bf16 %v981
        %v1018 = vunpack.c.h.bf16 %v981
        %v1019 = vunpack.c.l.bf16 %v982
        %v1020 = vunpack.c.h.bf16 %v982
        %v1021 = vunpack.c.l.bf16 %v983
        %v1022 = vunpack.c.h.bf16 %v983
        %v1023 = vunpack.c.l.bf16 %v984
        %v1024 = vunpack.c.h.bf16 %v984
        %v1025 = vunpack.c.l.bf16 %v985
        %v1026 = vunpack.c.h.bf16 %v985
        %v1027 = vunpack.c.l.bf16 %v986
        %v1028 = vunpack.c.h.bf16 %v986
        %v1029 = vunpack.c.l.bf16 %v987
        %v1030 = vunpack.c.h.bf16 %v987
        %v1031 = vunpack.c.l.bf16 %v988
        %v1032 = vunpack.c.h.bf16 %v988
        %v1033 = vunpack.c.l.bf16 %v989
        %v1034 = vunpack.c.h.bf16 %v989
        %v1035 = vunpack.c.l.bf16 %v990
        %v1036 = vunpack.c.h.bf16 %v990
        %v1037 = vunpack.c.l.bf16 %v991
        %v1038 = vunpack.c.h.bf16 %v991
        %v1039 = vunpack.c.l.bf16 %v992
        %v1040 = vunpack.c.h.bf16 %v992
        %v1041 = vunpack.c.l.bf16 %v993
        %v1042 = vunpack.c.h.bf16 %v993
        %v1043 = vunpack.c.l.bf16 %v994
        %v1044 = vunpack.c.h.bf16 %v994
        %v1045 = vunpack.c.l.bf16 %v995
        %v1046 = vunpack.c.h.bf16 %v995
        %v1047 = vunpack.c.l.bf16 %v996
        %v1048 = vunpack.c.h.bf16 %v996
        %v1049 = vunpack.c.l.bf16 %v997
        %v1050 = vunpack.c.h.bf16 %v997
        %v1051 = vunpack.c.l.bf16 %v998
        %v1052 = vunpack.c.h.bf16 %v998
        %v1053 = vunpack.c.l.bf16 %v999
        %v1054 = vunpack.c.h.bf16 %v999
        %v1055 = vunpack.c.l.bf16 %v1000
        %v1056 = vunpack.c.h.bf16 %v1000
        %v1057 = vunpack.c.l.bf16 %v1001
        %v1058 = vunpack.c.h.bf16 %v1001
        %v1059 = vunpack.c.l.bf16 %v1002
        %v1060 = vunpack.c.h.bf16 %v1002
        %v1061 = vunpack.c.l.bf16 %v1003
        %v1062 = vunpack.c.h.bf16 %v1003
        %v1063 = vunpack.c.l.bf16 %v1004
        %v1064 = vunpack.c.h.bf16 %v1004
        %v1065 = vunpack.c.l.bf16 %v1005
        %v1066 = vunpack.c.h.bf16 %v1005
        %v1067 = vunpack.c.l.bf16 %v1006
        %v1068 = vunpack.c.h.bf16 %v1006
        %v1069 = vunpack.c.l.bf16 %v1007
        %v1070 = vunpack.c.h.bf16 %v1007
        %v1071 = vunpack.c.l.bf16 %v1008
        %v1072 = vunpack.c.h.bf16 %v1008
        %vm1073 = vcmp.gt.f32.partialorder %v1009, 0.0
        %vm1074 = vcmp.gt.f32.partialorder %v1010, 0.0
        %vm1075 = vcmp.gt.f32.partialorder %v1011, 0.0
        %vm1076 = vcmp.gt.f32.partialorder %v1012, 0.0
        %vm1077 = vcmp.gt.f32.partialorder %v1013, 0.0
        %vm1078 = vcmp.gt.f32.partialorder %v1014, 0.0
        %vm1079 = vcmp.gt.f32.partialorder %v1015, 0.0
        %vm1080 = vcmp.gt.f32.partialorder %v1016, 0.0
        %vm1081 = vcmp.gt.f32.partialorder %v1017, 0.0
        %vm1082 = vcmp.gt.f32.partialorder %v1018, 0.0
        %vm1083 = vcmp.gt.f32.partialorder %v1019, 0.0
        %vm1084 = vcmp.gt.f32.partialorder %v1020, 0.0
        %vm1085 = vcmp.gt.f32.partialorder %v1021, 0.0
        %vm1086 = vcmp.gt.f32.partialorder %v1022, 0.0
        %vm1087 = vcmp.gt.f32.partialorder %v1023, 0.0
        %vm1088 = vcmp.gt.f32.partialorder %v1024, 0.0
        %vm1089 = vcmp.gt.f32.partialorder %v1025, 0.0
        %vm1090 = vcmp.gt.f32.partialorder %v1026, 0.0
        %vm1091 = vcmp.gt.f32.partialorder %v1027, 0.0
        %vm1092 = vcmp.gt.f32.partialorder %v1028, 0.0
        %vm1093 = vcmp.gt.f32.partialorder %v1029, 0.0
        %vm1094 = vcmp.gt.f32.partialorder %v1030, 0.0
        %vm1095 = vcmp.gt.f32.partialorder %v1031, 0.0
        %vm1096 = vcmp.gt.f32.partialorder %v1032, 0.0
        %vm1097 = vcmp.gt.f32.partialorder %v1033, 0.0
        %vm1098 = vcmp.gt.f32.partialorder %v1034, 0.0
        %vm1099 = vcmp.gt.f32.partialorder %v1035, 0.0
        %vm1100 = vcmp.gt.f32.partialorder %v1036, 0.0
        %vm1101 = vcmp.gt.f32.partialorder %v1037, 0.0
        %vm1102 = vcmp.gt.f32.partialorder %v1038, 0.0
        %vm1103 = vcmp.gt.f32.partialorder %v1039, 0.0
        %vm1104 = vcmp.gt.f32.partialorder %v1040, 0.0
        %vm1105 = vcmp.gt.f32.partialorder %v1041, 0.0
        %vm1106 = vcmp.gt.f32.partialorder %v1042, 0.0
        %vm1107 = vcmp.gt.f32.partialorder %v1043, 0.0
        %vm1108 = vcmp.gt.f32.partialorder %v1044, 0.0
        %vm1109 = vcmp.gt.f32.partialorder %v1045, 0.0
        %vm1110 = vcmp.gt.f32.partialorder %v1046, 0.0
        %vm1111 = vcmp.gt.f32.partialorder %v1047, 0.0
        %vm1112 = vcmp.gt.f32.partialorder %v1048, 0.0
        %vm1113 = vcmp.gt.f32.partialorder %v1049, 0.0
        %vm1114 = vcmp.gt.f32.partialorder %v1050, 0.0
        %vm1115 = vcmp.gt.f32.partialorder %v1051, 0.0
        %vm1116 = vcmp.gt.f32.partialorder %v1052, 0.0
        %vm1117 = vcmp.gt.f32.partialorder %v1053, 0.0
        %vm1118 = vcmp.gt.f32.partialorder %v1054, 0.0
        %vm1119 = vcmp.gt.f32.partialorder %v1055, 0.0
        %vm1120 = vcmp.gt.f32.partialorder %v1056, 0.0
        %vm1121 = vcmp.gt.f32.partialorder %v1057, 0.0
        %vm1122 = vcmp.gt.f32.partialorder %v1058, 0.0
        %vm1123 = vcmp.gt.f32.partialorder %v1059, 0.0
        %vm1124 = vcmp.gt.f32.partialorder %v1060, 0.0
        %vm1125 = vcmp.gt.f32.partialorder %v1061, 0.0
        %vm1126 = vcmp.gt.f32.partialorder %v1062, 0.0
        %vm1127 = vcmp.gt.f32.partialorder %v1063, 0.0
        %vm1128 = vcmp.gt.f32.partialorder %v1064, 0.0
        %vm1129 = vcmp.gt.f32.partialorder %v1065, 0.0
        %vm1130 = vcmp.gt.f32.partialorder %v1066, 0.0
        %vm1131 = vcmp.gt.f32.partialorder %v1067, 0.0
        %vm1132 = vcmp.gt.f32.partialorder %v1068, 0.0
        %vm1133 = vcmp.gt.f32.partialorder %v1069, 0.0
        %vm1134 = vcmp.gt.f32.partialorder %v1070, 0.0
        %vm1135 = vcmp.gt.f32.partialorder %v1071, 0.0
        %vm1136 = vcmp.gt.f32.partialorder %v1072, 0.0
        %v1137 = vmul.f32 %v1009, 0.20019531
        %v1138 = vmul.f32 %v1010, 0.20019531
        %v1139 = vmul.f32 %v1011, 0.20019531
        %v1140 = vmul.f32 %v1012, 0.20019531
        %v1141 = vmul.f32 %v1013, 0.20019531
        %v1142 = vmul.f32 %v1014, 0.20019531
        %v1143 = vmul.f32 %v1015, 0.20019531
        %v1144 = vmul.f32 %v1016, 0.20019531
        %v1145 = vmul.f32 %v1017, 0.20019531
        %v1146 = vmul.f32 %v1018, 0.20019531
        %v1147 = vmul.f32 %v1019, 0.20019531
        %v1148 = vmul.f32 %v1020, 0.20019531
        %v1149 = vmul.f32 %v1021, 0.20019531
        %v1150 = vmul.f32 %v1022, 0.20019531
        %v1151 = vmul.f32 %v1023, 0.20019531
        %v1152 = vmul.f32 %v1024, 0.20019531
        %v1153 = vmul.f32 %v1025, 0.20019531
        %v1154 = vmul.f32 %v1026, 0.20019531
        %v1155 = vmul.f32 %v1027, 0.20019531
        %v1156 = vmul.f32 %v1028, 0.20019531
        %v1157 = vmul.f32 %v1029, 0.20019531
        %v1158 = vmul.f32 %v1030, 0.20019531
        %v1159 = vmul.f32 %v1031, 0.20019531
        %v1160 = vmul.f32 %v1032, 0.20019531
        %v1161 = vmul.f32 %v1033, 0.20019531
        %v1162 = vmul.f32 %v1034, 0.20019531
        %v1163 = vmul.f32 %v1035, 0.20019531
        %v1164 = vmul.f32 %v1036, 0.20019531
        %v1165 = vmul.f32 %v1037, 0.20019531
        %v1166 = vmul.f32 %v1038, 0.20019531
        %v1167 = vmul.f32 %v1039, 0.20019531
        %v1168 = vmul.f32 %v1040, 0.20019531
        %v1169 = vmul.f32 %v1041, 0.20019531
        %v1170 = vmul.f32 %v1042, 0.20019531
        %v1171 = vmul.f32 %v1043, 0.20019531
        %v1172 = vmul.f32 %v1044, 0.20019531
        %v1173 = vmul.f32 %v1045, 0.20019531
        %v1174 = vmul.f32 %v1046, 0.20019531
        %v1175 = vmul.f32 %v1047, 0.20019531
        %v1176 = vmul.f32 %v1048, 0.20019531
        %v1177 = vmul.f32 %v1049, 0.20019531
        %v1178 = vmul.f32 %v1050, 0.20019531
        %v1179 = vmul.f32 %v1051, 0.20019531
        %v1180 = vmul.f32 %v1052, 0.20019531
        %v1181 = vmul.f32 %v1053, 0.20019531
        %v1182 = vmul.f32 %v1054, 0.20019531
        %v1183 = vmul.f32 %v1055, 0.20019531
        %v1184 = vmul.f32 %v1056, 0.20019531
        %v1185 = vmul.f32 %v1057, 0.20019531
        %v1186 = vmul.f32 %v1058, 0.20019531
        %v1187 = vmul.f32 %v1059, 0.20019531
        %v1188 = vmul.f32 %v1060, 0.20019531
        %v1189 = vmul.f32 %v1061, 0.20019531
        %v1190 = vmul.f32 %v1062, 0.20019531
        %v1191 = vmul.f32 %v1063, 0.20019531
        %v1192 = vmul.f32 %v1064, 0.20019531
        %v1193 = vmul.f32 %v1065, 0.20019531
        %v1194 = vmul.f32 %v1066, 0.20019531
        %v1195 = vmul.f32 %v1067, 0.20019531
        %v1196 = vmul.f32 %v1068, 0.20019531
        %v1197 = vmul.f32 %v1069, 0.20019531
        %v1198 = vmul.f32 %v1070, 0.20019531
        %v1199 = vmul.f32 %v1071, 0.20019531
        %v1200 = vmul.f32 %v1072, 0.20019531
        %v1201 = vpack.c.bf16 %v1138, %v1137
        %v1202 = vpack.c.bf16 %v1140, %v1139
        %v1203 = vpack.c.bf16 %v1142, %v1141
        %v1204 = vpack.c.bf16 %v1144, %v1143
        %v1205 = vpack.c.bf16 %v1146, %v1145
        %v1206 = vpack.c.bf16 %v1148, %v1147
        %v1207 = vpack.c.bf16 %v1150, %v1149
        %v1208 = vpack.c.bf16 %v1152, %v1151
        %v1209 = vpack.c.bf16 %v1154, %v1153
        %v1210 = vpack.c.bf16 %v1156, %v1155
        %v1211 = vpack.c.bf16 %v1158, %v1157
        %v1212 = vpack.c.bf16 %v1160, %v1159
        %v1213 = vpack.c.bf16 %v1162, %v1161
        %v1214 = vpack.c.bf16 %v1164, %v1163
        %v1215 = vpack.c.bf16 %v1166, %v1165
        %v1216 = vpack.c.bf16 %v1168, %v1167
        %v1217 = vpack.c.bf16 %v1170, %v1169
        %v1218 = vpack.c.bf16 %v1172, %v1171
        %v1219 = vpack.c.bf16 %v1174, %v1173
        %v1220 = vpack.c.bf16 %v1176, %v1175
        %v1221 = vpack.c.bf16 %v1178, %v1177
        %v1222 = vpack.c.bf16 %v1180, %v1179
        %v1223 = vpack.c.bf16 %v1182, %v1181
        %v1224 = vpack.c.bf16 %v1184, %v1183
        %v1225 = vpack.c.bf16 %v1186, %v1185
        %v1226 = vpack.c.bf16 %v1188, %v1187
        %v1227 = vpack.c.bf16 %v1190, %v1189
        %v1228 = vpack.c.bf16 %v1192, %v1191
        %v1229 = vpack.c.bf16 %v1194, %v1193
        %v1230 = vpack.c.bf16 %v1196, %v1195
        %v1231 = vpack.c.bf16 %v1198, %v1197
        %v1232 = vpack.c.bf16 %v1200, %v1199
        %vm1233 = vmpackc.low %vm1074, %vm1073
        %vm1234 = vmpackc.low %vm1076, %vm1075
        %vm1235 = vmpackc.low %vm1078, %vm1077
        %vm1236 = vmpackc.low %vm1080, %vm1079
        %vm1237 = vmpackc.low %vm1082, %vm1081
        %vm1238 = vmpackc.low %vm1084, %vm1083
        %vm1239 = vmpackc.low %vm1086, %vm1085
        %vm1240 = vmpackc.low %vm1088, %vm1087
        %vm1241 = vmpackc.low %vm1090, %vm1089
        %vm1242 = vmpackc.low %vm1092, %vm1091
        %vm1243 = vmpackc.low %vm1094, %vm1093
        %vm1244 = vmpackc.low %vm1096, %vm1095
        %vm1245 = vmpackc.low %vm1098, %vm1097
        %vm1246 = vmpackc.low %vm1100, %vm1099
        %vm1247 = vmpackc.low %vm1102, %vm1101
        %vm1248 = vmpackc.low %vm1104, %vm1103
        %vm1249 = vmpackc.low %vm1106, %vm1105
        %vm1250 = vmpackc.low %vm1108, %vm1107
        %vm1251 = vmpackc.low %vm1110, %vm1109
        %vm1252 = vmpackc.low %vm1112, %vm1111
        %vm1253 = vmpackc.low %vm1114, %vm1113
        %vm1254 = vmpackc.low %vm1116, %vm1115
        %vm1255 = vmpackc.low %vm1118, %vm1117
        %vm1256 = vmpackc.low %vm1120, %vm1119
        %vm1257 = vmpackc.low %vm1122, %vm1121
        %vm1258 = vmpackc.low %vm1124, %vm1123
        %vm1259 = vmpackc.low %vm1126, %vm1125
        %vm1260 = vmpackc.low %vm1128, %vm1127
        %vm1261 = vmpackc.low %vm1130, %vm1129
        %vm1262 = vmpackc.low %vm1132, %vm1131
        %vm1263 = vmpackc.low %vm1134, %vm1133
        %vm1264 = vmpackc.low %vm1136, %vm1135
        %v1265 = vsel %vm1233, %v977, %v1201
        %v1266 = vsel %vm1234, %v978, %v1202
        %v1267 = vsel %vm1235, %v979, %v1203
        %v1268 = vsel %vm1236, %v980, %v1204
        %v1269 = vsel %vm1237, %v981, %v1205
        %v1270 = vsel %vm1238, %v982, %v1206
        %v1271 = vsel %vm1239, %v983, %v1207
        %v1272 = vsel %vm1240, %v984, %v1208
        %v1273 = vsel %vm1241, %v985, %v1209
        %v1274 = vsel %vm1242, %v986, %v1210
        %v1275 = vsel %vm1243, %v987, %v1211
        %v1276 = vsel %vm1244, %v988, %v1212
        %v1277 = vsel %vm1245, %v989, %v1213
        %v1278 = vsel %vm1246, %v990, %v1214
        %v1279 = vsel %vm1247, %v991, %v1215
        %v1280 = vsel %vm1248, %v992, %v1216
        %v1281 = vsel %vm1249, %v993, %v1217
        %v1282 = vsel %vm1250, %v994, %v1218
        %v1283 = vsel %vm1251, %v995, %v1219
        %v1284 = vsel %vm1252, %v996, %v1220
        %v1285 = vsel %vm1253, %v997, %v1221
        %v1286 = vsel %vm1254, %v998, %v1222
        %v1287 = vsel %vm1255, %v999, %v1223
        %v1288 = vsel %vm1256, %v1000, %v1224
        %v1289 = vsel %vm1257, %v1001, %v1225
        %v1290 = vsel %vm1258, %v1002, %v1226
        %v1291 = vsel %vm1259, %v1003, %v1227
        %v1292 = vsel %vm1260, %v1004, %v1228
        %v1293 = vsel %vm1261, %v1005, %v1229
        %v1294 = vsel %vm1262, %v1006, %v1230
        %v1295 = vsel %vm1263, %v1007, %v1231
        %v1296 = vsel %vm1264, %v1008, %v1232
        %v1297 = vld [vmem:[%s3] sm:$0xf]
        %v1298 = vld [vmem:[%s3 + $0x4] sm:$0xf]
        %v1299 = vld [vmem:[%s3 + $0x8] sm:$0xf]
        %v1300 = vld [vmem:[%s3 + $0xc] sm:$0xf]
        %v1301 = vld [vmem:[%s3 + $0x10] sm:$0xf]
        %v1302 = vld [vmem:[%s3 + $0x14] sm:$0xf]
        %v1303 = vld [vmem:[%s3 + $0x18] sm:$0xf]
        %v1304 = vld [vmem:[%s3 + $0x1c] sm:$0xf]
        %v1305 = vld [vmem:[%s3 + $0x20] sm:$0xf]
        %v1306 = vld [vmem:[%s3 + $0x24] sm:$0xf]
        %v1307 = vld [vmem:[%s3 + $0x28] sm:$0xf]
        %v1308 = vld [vmem:[%s3 + $0x2c] sm:$0xf]
        %v1309 = vld [vmem:[%s3 + $0x30] sm:$0xf]
        %v1310 = vld [vmem:[%s3 + $0x34] sm:$0xf]
        %v1311 = vld [vmem:[%s3 + $0x38] sm:$0xf]
        %v1312 = vld [vmem:[%s3 + $0x3c] sm:$0xf]
        %v1329 = vunpack.c.l.b16 %v1297
        %v1330 = vunpack.c.l.b16 %v1298
        %v1331 = vunpack.c.l.b16 %v1299
        %v1332 = vunpack.c.l.b16 %v1300
        %v1333 = vunpack.c.l.b16 %v1301
        %v1334 = vunpack.c.l.b16 %v1302
        %v1335 = vunpack.c.l.b16 %v1303
        %v1336 = vunpack.c.l.b16 %v1304
        %v1337 = vunpack.c.l.b16 %v1305
        %v1338 = vunpack.c.l.b16 %v1306
        %v1339 = vunpack.c.l.b16 %v1307
        %v1340 = vunpack.c.l.b16 %v1308
        %v1341 = vunpack.c.l.b16 %v1309
        %v1342 = vunpack.c.l.b16 %v1310
        %v1343 = vunpack.c.l.b16 %v1311
        %v1344 = vunpack.c.l.b16 %v1312
        %v1345 = vpack.c.b16 %v1330, %v1329
        %v1346 = vpack.c.b16 %v1332, %v1331
        %v1347 = vpack.c.b16 %v1334, %v1333
        %v1348 = vpack.c.b16 %v1336, %v1335
        %v1349 = vpack.c.b16 %v1338, %v1337
        %v1350 = vpack.c.b16 %v1340, %v1339
        %v1351 = vpack.c.b16 %v1342, %v1341
        %v1352 = vpack.c.b16 %v1344, %v1343
        %v1393 = vunpack.c.l.b16 %v1265
        %v1394 = vunpack.c.h.b16 %v1265
        %v1395 = vunpack.c.l.b16 %v1266
        %v1396 = vunpack.c.h.b16 %v1266
        %v1397 = vunpack.c.l.b16 %v1267
        %v1398 = vunpack.c.h.b16 %v1267
        %v1399 = vunpack.c.l.b16 %v1268
        %v1400 = vunpack.c.h.b16 %v1268
        %v1401 = vunpack.c.l.b16 %v1269
        %v1402 = vunpack.c.h.b16 %v1269
        %v1403 = vunpack.c.l.b16 %v1270
        %v1404 = vunpack.c.h.b16 %v1270
        %v1405 = vunpack.c.l.b16 %v1271
        %v1406 = vunpack.c.h.b16 %v1271
        %v1407 = vunpack.c.l.b16 %v1272
        %v1408 = vunpack.c.h.b16 %v1272
        %v1409 = vunpack.c.l.b16 %v1273
        %v1410 = vunpack.c.h.b16 %v1273
        %v1411 = vunpack.c.l.b16 %v1274
        %v1412 = vunpack.c.h.b16 %v1274
        %v1413 = vunpack.c.l.b16 %v1275
        %v1414 = vunpack.c.h.b16 %v1275
        %v1415 = vunpack.c.l.b16 %v1276
        %v1416 = vunpack.c.h.b16 %v1276
        %v1417 = vunpack.c.l.b16 %v1277
        %v1418 = vunpack.c.h.b16 %v1277
        %v1419 = vunpack.c.l.b16 %v1278
        %v1420 = vunpack.c.h.b16 %v1278
        %v1421 = vunpack.c.l.b16 %v1279
        %v1422 = vunpack.c.h.b16 %v1279
        %v1423 = vunpack.c.l.b16 %v1280
        %v1424 = vunpack.c.h.b16 %v1280
        %v1425 = vunpack.c.l.b16 %v1281
        %v1426 = vunpack.c.h.b16 %v1281
        %v1427 = vunpack.c.l.b16 %v1282
        %v1428 = vunpack.c.h.b16 %v1282
        %v1429 = vunpack.c.l.b16 %v1283
        %v1430 = vunpack.c.h.b16 %v1283
        %v1431 = vunpack.c.l.b16 %v1284
        %v1432 = vunpack.c.h.b16 %v1284
        %v1433 = vunpack.c.l.b16 %v1285
        %v1434 = vunpack.c.h.b16 %v1285
        %v1435 = vunpack.c.l.b16 %v1286
        %v1436 = vunpack.c.h.b16 %v1286
        %v1437 = vunpack.c.l.b16 %v1287
        %v1438 = vunpack.c.h.b16 %v1287
        %v1439 = vunpack.c.l.b16 %v1288
        %v1440 = vunpack.c.h.b16 %v1288
        %v1441 = vunpack.c.l.b16 %v1289
        %v1442 = vunpack.c.h.b16 %v1289
        %v1443 = vunpack.c.l.b16 %v1290
        %v1444 = vunpack.c.h.b16 %v1290
        %v1445 = vunpack.c.l.b16 %v1291
        %v1446 = vunpack.c.h.b16 %v1291
        %v1447 = vunpack.c.l.b16 %v1292
        %v1448 = vunpack.c.h.b16 %v1292
        %v1449 = vunpack.c.l.b16 %v1293
        %v1450 = vunpack.c.h.b16 %v1293
        %v1451 = vunpack.c.l.b16 %v1294
        %v1452 = vunpack.c.h.b16 %v1294
        %v1453 = vunpack.c.l.b16 %v1295
        %v1454 = vunpack.c.h.b16 %v1295
        %v1455 = vunpack.c.l.b16 %v1296
        %v1456 = vunpack.c.h.b16 %v1296
        %v1457 = vpack.c.b16 %v1397, %v1393
        %v1458 = vpack.c.b16 %v1398, %v1394
        %v1459 = vpack.c.b16 %v1399, %v1395
        %v1460 = vpack.c.b16 %v1400, %v1396
        %v1461 = vpack.c.b16 %v1405, %v1401
        %v1462 = vpack.c.b16 %v1406, %v1402
        %v1463 = vpack.c.b16 %v1407, %v1403
        %v1464 = vpack.c.b16 %v1408, %v1404
        %v1465 = vpack.c.b16 %v1413, %v1409
        %v1466 = vpack.c.b16 %v1414, %v1410
        %v1467 = vpack.c.b16 %v1415, %v1411
        %v1468 = vpack.c.b16 %v1416, %v1412
        %v1469 = vpack.c.b16 %v1421, %v1417
        %v1470 = vpack.c.b16 %v1422, %v1418
        %v1471 = vpack.c.b16 %v1423, %v1419
        %v1472 = vpack.c.b16 %v1424, %v1420
        %v1473 = vpack.c.b16 %v1429, %v1425
        %v1474 = vpack.c.b16 %v1430, %v1426
        %v1475 = vpack.c.b16 %v1431, %v1427
        %v1476 = vpack.c.b16 %v1432, %v1428
        %v1477 = vpack.c.b16 %v1437, %v1433
        %v1478 = vpack.c.b16 %v1438, %v1434
        %v1479 = vpack.c.b16 %v1439, %v1435
        %v1480 = vpack.c.b16 %v1440, %v1436
        %v1481 = vpack.c.b16 %v1445, %v1441
        %v1482 = vpack.c.b16 %v1446, %v1442
        %v1483 = vpack.c.b16 %v1447, %v1443
        %v1484 = vpack.c.b16 %v1448, %v1444
        %v1485 = vpack.c.b16 %v1453, %v1449
        %v1486 = vpack.c.b16 %v1454, %v1450
        %v1487 = vpack.c.b16 %v1455, %v1451
        %v1488 = vpack.c.b16 %v1456, %v1452
        %1521 = vmatpush.bf16.msra.mxu0 %v1485
        %1522 = vmatpush.bf16.msra.mxu0 %v1481
        %1523 = vmatpush.bf16.msra.mxu0 %v1477
        %1524 = vmatpush.bf16.msra.mxu0 %v1473
        %1525 = vmatpush.bf16.msra.mxu0 %v1469
        %1526 = vmatpush.bf16.msra.mxu0 %v1465
        %1527 = vmatpush.bf16.msra.mxu0 %v1461
        %1528 = vmatpush.bf16.msra.mxu0 %v1457
        %1529 = vmatmul.bf16.gmra.mxu0 %v1345
        %v1530 = vpop.f32.mrf.mxu0
        %v1531 = vadd.f32 0.0, %v1530
        %v1532 = vpop.f32.mrf.mxu0
        %v1533 = vadd.f32 0.0, %v1532
        %1534 = vmatmul.bf16.gmra.mxu0 %v1346
        %v1535 = vpop.f32.mrf.mxu0
        %v1536 = vadd.f32 0.0, %v1535
        %v1537 = vpop.f32.mrf.mxu0
        %v1538 = vadd.f32 0.0, %v1537
        %1539 = vmatmul.bf16.gmra.mxu0 %v1347
        %v1540 = vpop.f32.mrf.mxu0
        %v1541 = vadd.f32 0.0, %v1540
        %v1542 = vpop.f32.mrf.mxu0
        %v1543 = vadd.f32 0.0, %v1542
        %1544 = vmatmul.bf16.gmra.mxu0 %v1348
        %v1545 = vpop.f32.mrf.mxu0
        %v1546 = vadd.f32 0.0, %v1545
        %v1547 = vpop.f32.mrf.mxu0
        %v1548 = vadd.f32 0.0, %v1547
        %1549 = vmatmul.bf16.gmra.mxu0 %v1349
        %v1550 = vpop.f32.mrf.mxu0
        %v1551 = vadd.f32 0.0, %v1550
        %v1552 = vpop.f32.mrf.mxu0
        %v1553 = vadd.f32 0.0, %v1552
        %1554 = vmatmul.bf16.gmra.mxu0 %v1350
        %v1555 = vpop.f32.mrf.mxu0
        %v1556 = vadd.f32 0.0, %v1555
        %v1557 = vpop.f32.mrf.mxu0
        %v1558 = vadd.f32 0.0, %v1557
        %1559 = vmatmul.bf16.gmra.mxu0 %v1351
        %v1560 = vpop.f32.mrf.mxu0
        %v1561 = vadd.f32 0.0, %v1560
        %v1562 = vpop.f32.mrf.mxu0
        %v1563 = vadd.f32 0.0, %v1562
        %1564 = vmatmul.bf16.gmra.mxu0 %v1352
        %v1565 = vpop.f32.mrf.mxu0
        %v1566 = vadd.f32 0.0, %v1565
        %v1567 = vpop.f32.mrf.mxu0
        %v1568 = vadd.f32 0.0, %v1567
        %1569 = vdwg.mxu0
        %1570 = vmatpush.bf16.msra.mxu0 %v1486
        %1571 = vmatpush.bf16.msra.mxu0 %v1482
        %1572 = vmatpush.bf16.msra.mxu0 %v1478
        %1573 = vmatpush.bf16.msra.mxu0 %v1474
        %1574 = vmatpush.bf16.msra.mxu0 %v1470
        %1575 = vmatpush.bf16.msra.mxu0 %v1466
        %1576 = vmatpush.bf16.msra.mxu0 %v1462
        %1577 = vmatpush.bf16.msra.mxu0 %v1458
        %1578 = vmatmul.bf16.gmra.mxu0 %v1345
        %v1579 = vpop.f32.mrf.mxu0
        %v1580 = vadd.f32 0.0, %v1579
        %v1581 = vpop.f32.mrf.mxu0
        %v1582 = vadd.f32 0.0, %v1581
        %1583 = vmatmul.bf16.gmra.mxu0 %v1346
        %v1584 = vpop.f32.mrf.mxu0
        %v1585 = vadd.f32 0.0, %v1584
        %v1586 = vpop.f32.mrf.mxu0
        %v1587 = vadd.f32 0.0, %v1586
        %1588 = vmatmul.bf16.gmra.mxu0 %v1347
        %v1589 = vpop.f32.mrf.mxu0
        %v1590 = vadd.f32 0.0, %v1589
        %v1591 = vpop.f32.mrf.mxu0
        %v1592 = vadd.f32 0.0, %v1591
        %1593 = vmatmul.bf16.gmra.mxu0 %v1348
        %v1594 = vpop.f32.mrf.mxu0
        %v1595 = vadd.f32 0.0, %v1594
        %v1596 = vpop.f32.mrf.mxu0
        %v1597 = vadd.f32 0.0, %v1596
        %1598 = vmatmul.bf16.gmra.mxu0 %v1349
        %v1599 = vpop.f32.mrf.mxu0
        %v1600 = vadd.f32 0.0, %v1599
        %v1601 = vpop.f32.mrf.mxu0
        %v1602 = vadd.f32 0.0, %v1601
        %1603 = vmatmul.bf16.gmra.mxu0 %v1350
        %v1604 = vpop.f32.mrf.mxu0
        %v1605 = vadd.f32 0.0, %v1604
        %v1606 = vpop.f32.mrf.mxu0
        %v1607 = vadd.f32 0.0, %v1606
        %1608 = vmatmul.bf16.gmra.mxu0 %v1351
        %v1609 = vpop.f32.mrf.mxu0
        %v1610 = vadd.f32 0.0, %v1609
        %v1611 = vpop.f32.mrf.mxu0
        %v1612 = vadd.f32 0.0, %v1611
        %1613 = vmatmul.bf16.gmra.mxu0 %v1352
        %v1614 = vpop.f32.mrf.mxu0
        %v1615 = vadd.f32 0.0, %v1614
        %v1616 = vpop.f32.mrf.mxu0
        %v1617 = vadd.f32 0.0, %v1616
        %1618 = vdwg.mxu0
        %1619 = vmatpush.bf16.msra.mxu0 %v1487
        %1620 = vmatpush.bf16.msra.mxu0 %v1483
        %1621 = vmatpush.bf16.msra.mxu0 %v1479
        %1622 = vmatpush.bf16.msra.mxu0 %v1475
        %1623 = vmatpush.bf16.msra.mxu0 %v1471
        %1624 = vmatpush.bf16.msra.mxu0 %v1467
        %1625 = vmatpush.bf16.msra.mxu0 %v1463
        %1626 = vmatpush.bf16.msra.mxu0 %v1459
        %1627 = vmatmul.bf16.gmra.mxu0 %v1345
        %v1628 = vpop.f32.mrf.mxu0
        %v1629 = vadd.f32 0.0, %v1628
        %v1630 = vpop.f32.mrf.mxu0
        %v1631 = vadd.f32 0.0, %v1630
        %1632 = vmatmul.bf16.gmra.mxu0 %v1346
        %v1633 = vpop.f32.mrf.mxu0
        %v1634 = vadd.f32 0.0, %v1633
        %v1635 = vpop.f32.mrf.mxu0
        %v1636 = vadd.f32 0.0, %v1635
        %1637 = vmatmul.bf16.gmra.mxu0 %v1347
        %v1638 = vpop.f32.mrf.mxu0
        %v1639 = vadd.f32 0.0, %v1638
        %v1640 = vpop.f32.mrf.mxu0
        %v1641 = vadd.f32 0.0, %v1640
        %1642 = vmatmul.bf16.gmra.mxu0 %v1348
        %v1643 = vpop.f32.mrf.mxu0
        %v1644 = vadd.f32 0.0, %v1643
        %v1645 = vpop.f32.mrf.mxu0
        %v1646 = vadd.f32 0.0, %v1645
        %1647 = vmatmul.bf16.gmra.mxu0 %v1349
        %v1648 = vpop.f32.mrf.mxu0
        %v1649 = vadd.f32 0.0, %v1648
        %v1650 = vpop.f32.mrf.mxu0
        %v1651 = vadd.f32 0.0, %v1650
        %1652 = vmatmul.bf16.gmra.mxu0 %v1350
        %v1653 = vpop.f32.mrf.mxu0
        %v1654 = vadd.f32 0.0, %v1653
        %v1655 = vpop.f32.mrf.mxu0
        %v1656 = vadd.f32 0.0, %v1655
        %1657 = vmatmul.bf16.gmra.mxu0 %v1351
        %v1658 = vpop.f32.mrf.mxu0
        %v1659 = vadd.f32 0.0, %v1658
        %v1660 = vpop.f32.mrf.mxu0
        %v1661 = vadd.f32 0.0, %v1660
        %1662 = vmatmul.bf16.gmra.mxu0 %v1352
        %v1663 = vpop.f32.mrf.mxu0
        %v1664 = vadd.f32 0.0, %v1663
        %v1665 = vpop.f32.mrf.mxu0
        %v1666 = vadd.f32 0.0, %v1665
        %1667 = vdwg.mxu0
        %1668 = vmatpush.bf16.msra.mxu0 %v1488
        %1669 = vmatpush.bf16.msra.mxu0 %v1484
        %1670 = vmatpush.bf16.msra.mxu0 %v1480
        %1671 = vmatpush.bf16.msra.mxu0 %v1476
        %1672 = vmatpush.bf16.msra.mxu0 %v1472
        %1673 = vmatpush.bf16.msra.mxu0 %v1468
        %1674 = vmatpush.bf16.msra.mxu0 %v1464
        %1675 = vmatpush.bf16.msra.mxu0 %v1460
        %1676 = vmatmul.bf16.gmra.mxu0 %v1345
        %v1677 = vpop.f32.mrf.mxu0
        %v1678 = vadd.f32 0.0, %v1677
        %v1679 = vpop.f32.mrf.mxu0
        %v1680 = vadd.f32 0.0, %v1679
        %1681 = vmatmul.bf16.gmra.mxu0 %v1346
        %v1682 = vpop.f32.mrf.mxu0
        %v1683 = vadd.f32 0.0, %v1682
        %v1684 = vpop.f32.mrf.mxu0
        %v1685 = vadd.f32 0.0, %v1684
        %1686 = vmatmul.bf16.gmra.mxu0 %v1347
        %v1687 = vpop.f32.mrf.mxu0
        %v1688 = vadd.f32 0.0, %v1687
        %v1689 = vpop.f32.mrf.mxu0
        %v1690 = vadd.f32 0.0, %v1689
        %1691 = vmatmul.bf16.gmra.mxu0 %v1348
        %v1692 = vpop.f32.mrf.mxu0
        %v1693 = vadd.f32 0.0, %v1692
        %v1694 = vpop.f32.mrf.mxu0
        %v1695 = vadd.f32 0.0, %v1694
        %1696 = vmatmul.bf16.gmra.mxu0 %v1349
        %v1697 = vpop.f32.mrf.mxu0
        %v1698 = vadd.f32 0.0, %v1697
        %v1699 = vpop.f32.mrf.mxu0
        %v1700 = vadd.f32 0.0, %v1699
        %1701 = vmatmul.bf16.gmra.mxu0 %v1350
        %v1702 = vpop.f32.mrf.mxu0
        %v1703 = vadd.f32 0.0, %v1702
        %v1704 = vpop.f32.mrf.mxu0
        %v1705 = vadd.f32 0.0, %v1704
        %1706 = vmatmul.bf16.gmra.mxu0 %v1351
        %v1707 = vpop.f32.mrf.mxu0
        %v1708 = vadd.f32 0.0, %v1707
        %v1709 = vpop.f32.mrf.mxu0
        %v1710 = vadd.f32 0.0, %v1709
        %1711 = vmatmul.bf16.gmra.mxu0 %v1352
        %v1712 = vpop.f32.mrf.mxu0
        %v1713 = vadd.f32 0.0, %v1712
        %v1714 = vpop.f32.mrf.mxu0
        %v1715 = vadd.f32 0.0, %v1714
        %1716 = vdwg.mxu0
        %v1717 = vpack.c.bf16 %v1580, %v1531
        %v1718 = vpack.c.bf16 %v1678, %v1629
        %v1719 = vpack.c.bf16 %v1582, %v1533
        %v1720 = vpack.c.bf16 %v1680, %v1631
        %v1721 = vpack.c.bf16 %v1585, %v1536
        %v1722 = vpack.c.bf16 %v1683, %v1634
        %v1723 = vpack.c.bf16 %v1587, %v1538
        %v1724 = vpack.c.bf16 %v1685, %v1636
        %v1725 = vpack.c.bf16 %v1590, %v1541
        %v1726 = vpack.c.bf16 %v1688, %v1639
        %v1727 = vpack.c.bf16 %v1592, %v1543
        %v1728 = vpack.c.bf16 %v1690, %v1641
        %v1729 = vpack.c.bf16 %v1595, %v1546
        %v1730 = vpack.c.bf16 %v1693, %v1644
        %v1731 = vpack.c.bf16 %v1597, %v1548
        %v1732 = vpack.c.bf16 %v1695, %v1646
        %v1733 = vpack.c.bf16 %v1600, %v1551
        %v1734 = vpack.c.bf16 %v1698, %v1649
        %v1735 = vpack.c.bf16 %v1602, %v1553
        %v1736 = vpack.c.bf16 %v1700, %v1651
        %v1737 = vpack.c.bf16 %v1605, %v1556
        %v1738 = vpack.c.bf16 %v1703, %v1654
        %v1739 = vpack.c.bf16 %v1607, %v1558
        %v1740 = vpack.c.bf16 %v1705, %v1656
        %v1741 = vpack.c.bf16 %v1610, %v1561
        %v1742 = vpack.c.bf16 %v1708, %v1659
        %v1743 = vpack.c.bf16 %v1612, %v1563
        %v1744 = vpack.c.bf16 %v1710, %v1661
        %v1745 = vpack.c.bf16 %v1615, %v1566
        %v1746 = vpack.c.bf16 %v1713, %v1664
        %v1747 = vpack.c.bf16 %v1617, %v1568
        %v1748 = vpack.c.bf16 %v1715, %v1666
        %v1749 = vld [vmem:[%s4] sm:$0xf]
        %v1750 = vld [vmem:[%s4 + $0x4] sm:$0xf]
        %v1751 = vld [vmem:[%s4 + $0x8] sm:$0xf]
        %v1752 = vld [vmem:[%s4 + $0xc] sm:$0xf]
        %v1753 = vld [vmem:[%s4 + $0x10] sm:$0xf]
        %v1754 = vld [vmem:[%s4 + $0x14] sm:$0xf]
        %v1755 = vld [vmem:[%s4 + $0x18] sm:$0xf]
        %v1756 = vld [vmem:[%s4 + $0x1c] sm:$0xf]
        %v1757 = vld [vmem:[%s4 + $0x20] sm:$0xf]
        %v1758 = vld [vmem:[%s4 + $0x24] sm:$0xf]
        %v1759 = vld [vmem:[%s4 + $0x28] sm:$0xf]
        %v1760 = vld [vmem:[%s4 + $0x2c] sm:$0xf]
        %v1761 = vld [vmem:[%s4 + $0x30] sm:$0xf]
        %v1762 = vld [vmem:[%s4 + $0x34] sm:$0xf]
        %v1763 = vld [vmem:[%s4 + $0x38] sm:$0xf]
        %v1764 = vld [vmem:[%s4 + $0x3c] sm:$0xf]
        %1766 = vset.pattern.permute.xlu0 0
        %1767 = vperm.xlu0 %1766, %v1749
        %v1768 = vpop.permute.xlu0 %1767
        %v1771 = vunpack.c.l.s4 839922192
        %v1772 = vunpack.c.0.s8 %v1771
        %v1773 = vperm.slane %v1768, %v1772
        %1775 = vset.pattern.permute.xlu0 0
        %1776 = vperm.xlu0 %1775, %v1750
        %v1777 = vpop.permute.xlu0 %1776
        %v1780 = vunpack.c.l.s4 839922192
        %v1781 = vunpack.c.0.s8 %v1780
        %v1782 = vperm.slane %v1777, %v1781
        %1784 = vset.pattern.permute.xlu0 0
        %1785 = vperm.xlu0 %1784, %v1751
        %v1786 = vpop.permute.xlu0 %1785
        %v1789 = vunpack.c.l.s4 839922192
        %v1790 = vunpack.c.0.s8 %v1789
        %v1791 = vperm.slane %v1786, %v1790
        %1793 = vset.pattern.permute.xlu0 0
        %1794 = vperm.xlu0 %1793, %v1752
        %v1795 = vpop.permute.xlu0 %1794
        %v1798 = vunpack.c.l.s4 839922192
        %v1799 = vunpack.c.0.s8 %v1798
        %v1800 = vperm.slane %v1795, %v1799
        %1802 = vset.pattern.permute.xlu0 0
        %1803 = vperm.xlu0 %1802, %v1753
        %v1804 = vpop.permute.xlu0 %1803
        %v1807 = vunpack.c.l.s4 839922192
        %v1808 = vunpack.c.0.s8 %v1807
        %v1809 = vperm.slane %v1804, %v1808
        %1811 = vset.pattern.permute.xlu0 0
        %1812 = vperm.xlu0 %1811, %v1754
        %v1813 = vpop.permute.xlu0 %1812
        %v1816 = vunpack.c.l.s4 839922192
        %v1817 = vunpack.c.0.s8 %v1816
        %v1818 = vperm.slane %v1813, %v1817
        %1820 = vset.pattern.permute.xlu0 0
        %1821 = vperm.xlu0 %1820, %v1755
        %v1822 = vpop.permute.xlu0 %1821
        %v1825 = vunpack.c.l.s4 839922192
        %v1826 = vunpack.c.0.s8 %v1825
        %v1827 = vperm.slane %v1822, %v1826
        %1829 = vset.pattern.permute.xlu0 0
        %1830 = vperm.xlu0 %1829, %v1756
        %v1831 = vpop.permute.xlu0 %1830
        %v1834 = vunpack.c.l.s4 839922192
        %v1835 = vunpack.c.0.s8 %v1834
        %v1836 = vperm.slane %v1831, %v1835
        %1838 = vset.pattern.permute.xlu0 0
        %1839 = vperm.xlu0 %1838, %v1757
        %v1840 = vpop.permute.xlu0 %1839
        %v1843 = vunpack.c.l.s4 839922192
        %v1844 = vunpack.c.0.s8 %v1843
        %v1845 = vperm.slane %v1840, %v1844
        %1847 = vset.pattern.permute.xlu0 0
        %1848 = vperm.xlu0 %1847, %v1758
        %v1849 = vpop.permute.xlu0 %1848
        %v1852 = vunpack.c.l.s4 839922192
        %v1853 = vunpack.c.0.s8 %v1852
        %v1854 = vperm.slane %v1849, %v1853
        %1856 = vset.pattern.permute.xlu0 0
        %1857 = vperm.xlu0 %1856, %v1759
        %v1858 = vpop.permute.xlu0 %1857
        %v1861 = vunpack.c.l.s4 839922192
        %v1862 = vunpack.c.0.s8 %v1861
        %v1863 = vperm.slane %v1858, %v1862
        %1865 = vset.pattern.permute.xlu0 0
        %1866 = vperm.xlu0 %1865, %v1760
        %v1867 = vpop.permute.xlu0 %1866
        %v1870 = vunpack.c.l.s4 839922192
        %v1871 = vunpack.c.0.s8 %v1870
        %v1872 = vperm.slane %v1867, %v1871
        %1874 = vset.pattern.permute.xlu0 0
        %1875 = vperm.xlu0 %1874, %v1761
        %v1876 = vpop.permute.xlu0 %1875
        %v1879 = vunpack.c.l.s4 839922192
        %v1880 = vunpack.c.0.s8 %v1879
        %v1881 = vperm.slane %v1876, %v1880
        %1883 = vset.pattern.permute.xlu0 0
        %1884 = vperm.xlu0 %1883, %v1762
        %v1885 = vpop.permute.xlu0 %1884
        %v1888 = vunpack.c.l.s4 839922192
        %v1889 = vunpack.c.0.s8 %v1888
        %v1890 = vperm.slane %v1885, %v1889
        %1892 = vset.pattern.permute.xlu0 0
        %1893 = vperm.xlu0 %1892, %v1763
        %v1894 = vpop.permute.xlu0 %1893
        %v1897 = vunpack.c.l.s4 839922192
        %v1898 = vunpack.c.0.s8 %v1897
        %v1899 = vperm.slane %v1894, %v1898
        %1901 = vset.pattern.permute.xlu0 0
        %1902 = vperm.xlu0 %1901, %v1764
        %v1903 = vpop.permute.xlu0 %1902
        %v1906 = vunpack.c.l.s4 839922192
        %v1907 = vunpack.c.0.s8 %v1906
        %v1908 = vperm.slane %v1903, %v1907
        %v1909 = vunpack.c.l.bf16 %v1717
        %v1910 = vunpack.c.h.bf16 %v1717
        %v1911 = vunpack.c.l.bf16 %v1718
        %v1912 = vunpack.c.h.bf16 %v1718
        %v1913 = vunpack.c.l.bf16 %v1719
        %v1914 = vunpack.c.h.bf16 %v1719
        %v1915 = vunpack.c.l.bf16 %v1720
        %v1916 = vunpack.c.h.bf16 %v1720
        %v1917 = vunpack.c.l.bf16 %v1721
        %v1918 = vunpack.c.h.bf16 %v1721
        %v1919 = vunpack.c.l.bf16 %v1722
        %v1920 = vunpack.c.h.bf16 %v1722
        %v1921 = vunpack.c.l.bf16 %v1723
        %v1922 = vunpack.c.h.bf16 %v1723
        %v1923 = vunpack.c.l.bf16 %v1724
        %v1924 = vunpack.c.h.bf16 %v1724
        %v1925 = vunpack.c.l.bf16 %v1725
        %v1926 = vunpack.c.h.bf16 %v1725
        %v1927 = vunpack.c.l.bf16 %v1726
        %v1928 = vunpack.c.h.bf16 %v1726
        %v1929 = vunpack.c.l.bf16 %v1727
        %v1930 = vunpack.c.h.bf16 %v1727
        %v1931 = vunpack.c.l.bf16 %v1728
        %v1932 = vunpack.c.h.bf16 %v1728
        %v1933 = vunpack.c.l.bf16 %v1729
        %v1934 = vunpack.c.h.bf16 %v1729
        %v1935 = vunpack.c.l.bf16 %v1730
        %v1936 = vunpack.c.h.bf16 %v1730
        %v1937 = vunpack.c.l.bf16 %v1731
        %v1938 = vunpack.c.h.bf16 %v1731
        %v1939 = vunpack.c.l.bf16 %v1732
        %v1940 = vunpack.c.h.bf16 %v1732
        %v1941 = vunpack.c.l.bf16 %v1733
        %v1942 = vunpack.c.h.bf16 %v1733
        %v1943 = vunpack.c.l.bf16 %v1734
        %v1944 = vunpack.c.h.bf16 %v1734
        %v1945 = vunpack.c.l.bf16 %v1735
        %v1946 = vunpack.c.h.bf16 %v1735
        %v1947 = vunpack.c.l.bf16 %v1736
        %v1948 = vunpack.c.h.bf16 %v1736
        %v1949 = vunpack.c.l.bf16 %v1737
        %v1950 = vunpack.c.h.bf16 %v1737
        %v1951 = vunpack.c.l.bf16 %v1738
        %v1952 = vunpack.c.h.bf16 %v1738
        %v1953 = vunpack.c.l.bf16 %v1739
        %v1954 = vunpack.c.h.bf16 %v1739
        %v1955 = vunpack.c.l.bf16 %v1740
        %v1956 = vunpack.c.h.bf16 %v1740
        %v1957 = vunpack.c.l.bf16 %v1741
        %v1958 = vunpack.c.h.bf16 %v1741
        %v1959 = vunpack.c.l.bf16 %v1742
        %v1960 = vunpack.c.h.bf16 %v1742
        %v1961 = vunpack.c.l.bf16 %v1743
        %v1962 = vunpack.c.h.bf16 %v1743
        %v1963 = vunpack.c.l.bf16 %v1744
        %v1964 = vunpack.c.h.bf16 %v1744
        %v1965 = vunpack.c.l.bf16 %v1745
        %v1966 = vunpack.c.h.bf16 %v1745
        %v1967 = vunpack.c.l.bf16 %v1746
        %v1968 = vunpack.c.h.bf16 %v1746
        %v1969 = vunpack.c.l.bf16 %v1747
        %v1970 = vunpack.c.h.bf16 %v1747
        %v1971 = vunpack.c.l.bf16 %v1748
        %v1972 = vunpack.c.h.bf16 %v1748
        %v1973 = vunpack.c.l.bf16 %v1773
        %v1974 = vunpack.c.l.bf16 %v1782
        %v1975 = vunpack.c.l.bf16 %v1791
        %v1976 = vunpack.c.l.bf16 %v1800
        %v1977 = vunpack.c.l.bf16 %v1809
        %v1978 = vunpack.c.l.bf16 %v1818
        %v1979 = vunpack.c.l.bf16 %v1827
        %v1980 = vunpack.c.l.bf16 %v1836
        %v1981 = vunpack.c.l.bf16 %v1845
        %v1982 = vunpack.c.l.bf16 %v1854
        %v1983 = vunpack.c.l.bf16 %v1863
        %v1984 = vunpack.c.l.bf16 %v1872
        %v1985 = vunpack.c.l.bf16 %v1881
        %v1986 = vunpack.c.l.bf16 %v1890
        %v1987 = vunpack.c.l.bf16 %v1899
        %v1988 = vunpack.c.l.bf16 %v1908
        %v1989 = vadd.f32 %v1909, %v1973
        %v1990 = vadd.f32 %v1910, %v1973
        %v1991 = vadd.f32 %v1911, %v1973
        %v1992 = vadd.f32 %v1912, %v1973
        %v1993 = vadd.f32 %v1913, %v1974
        %v1994 = vadd.f32 %v1914, %v1974
        %v1995 = vadd.f32 %v1915, %v1974
        %v1996 = vadd.f32 %v1916, %v1974
        %v1997 = vadd.f32 %v1917, %v1975
        %v1998 = vadd.f32 %v1918, %v1975
        %v1999 = vadd.f32 %v1919, %v1975
        %v2000 = vadd.f32 %v1920, %v1975
        %v2001 = vadd.f32 %v1921, %v1976
        %v2002 = vadd.f32 %v1922, %v1976
        %v2003 = vadd.f32 %v1923, %v1976
        %v2004 = vadd.f32 %v1924, %v1976
        %v2005 = vadd.f32 %v1925, %v1977
        %v2006 = vadd.f32 %v1926, %v1977
        %v2007 = vadd.f32 %v1927, %v1977
        %v2008 = vadd.f32 %v1928, %v1977
        %v2009 = vadd.f32 %v1929, %v1978
        %v2010 = vadd.f32 %v1930, %v1978
        %v2011 = vadd.f32 %v1931, %v1978
        %v2012 = vadd.f32 %v1932, %v1978
        %v2013 = vadd.f32 %v1933, %v1979
        %v2014 = vadd.f32 %v1934, %v1979
        %v2015 = vadd.f32 %v1935, %v1979
        %v2016 = vadd.f32 %v1936, %v1979
        %v2017 = vadd.f32 %v1937, %v1980
        %v2018 = vadd.f32 %v1938, %v1980
        %v2019 = vadd.f32 %v1939, %v1980
        %v2020 = vadd.f32 %v1940, %v1980
        %v2021 = vadd.f32 %v1941, %v1981
        %v2022 = vadd.f32 %v1942, %v1981
        %v2023 = vadd.f32 %v1943, %v1981
        %v2024 = vadd.f32 %v1944, %v1981
        %v2025 = vadd.f32 %v1945, %v1982
        %v2026 = vadd.f32 %v1946, %v1982
        %v2027 = vadd.f32 %v1947, %v1982
        %v2028 = vadd.f32 %v1948, %v1982
        %v2029 = vadd.f32 %v1949, %v1983
        %v2030 = vadd.f32 %v1950, %v1983
        %v2031 = vadd.f32 %v1951, %v1983
        %v2032 = vadd.f32 %v1952, %v1983
        %v2033 = vadd.f32 %v1953, %v1984
        %v2034 = vadd.f32 %v1954, %v1984
        %v2035 = vadd.f32 %v1955, %v1984
        %v2036 = vadd.f32 %v1956, %v1984
        %v2037 = vadd.f32 %v1957, %v1985
        %v2038 = vadd.f32 %v1958, %v1985
        %v2039 = vadd.f32 %v1959, %v1985
        %v2040 = vadd.f32 %v1960, %v1985
        %v2041 = vadd.f32 %v1961, %v1986
        %v2042 = vadd.f32 %v1962, %v1986
        %v2043 = vadd.f32 %v1963, %v1986
        %v2044 = vadd.f32 %v1964, %v1986
        %v2045 = vadd.f32 %v1965, %v1987
        %v2046 = vadd.f32 %v1966, %v1987
        %v2047 = vadd.f32 %v1967, %v1987
        %v2048 = vadd.f32 %v1968, %v1987
        %v2049 = vadd.f32 %v1969, %v1988
        %v2050 = vadd.f32 %v1970, %v1988
        %v2051 = vadd.f32 %v1971, %v1988
        %v2052 = vadd.f32 %v1972, %v1988
        %v2053 = vpack.c.bf16 %v1990, %v1989
        %v2054 = vpack.c.bf16 %v1992, %v1991
        %v2055 = vpack.c.bf16 %v1994, %v1993
        %v2056 = vpack.c.bf16 %v1996, %v1995
        %v2057 = vpack.c.bf16 %v1998, %v1997
        %v2058 = vpack.c.bf16 %v2000, %v1999
        %v2059 = vpack.c.bf16 %v2002, %v2001
        %v2060 = vpack.c.bf16 %v2004, %v2003
        %v2061 = vpack.c.bf16 %v2006, %v2005
        %v2062 = vpack.c.bf16 %v2008, %v2007
        %v2063 = vpack.c.bf16 %v2010, %v2009
        %v2064 = vpack.c.bf16 %v2012, %v2011
        %v2065 = vpack.c.bf16 %v2014, %v2013
        %v2066 = vpack.c.bf16 %v2016, %v2015
        %v2067 = vpack.c.bf16 %v2018, %v2017
        %v2068 = vpack.c.bf16 %v2020, %v2019
        %v2069 = vpack.c.bf16 %v2022, %v2021
        %v2070 = vpack.c.bf16 %v2024, %v2023
        %v2071 = vpack.c.bf16 %v2026, %v2025
        %v2072 = vpack.c.bf16 %v2028, %v2027
        %v2073 = vpack.c.bf16 %v2030, %v2029
        %v2074 = vpack.c.bf16 %v2032, %v2031
        %v2075 = vpack.c.bf16 %v2034, %v2033
        %v2076 = vpack.c.bf16 %v2036, %v2035
        %v2077 = vpack.c.bf16 %v2038, %v2037
        %v2078 = vpack.c.bf16 %v2040, %v2039
        %v2079 = vpack.c.bf16 %v2042, %v2041
        %v2080 = vpack.c.bf16 %v2044, %v2043
        %v2081 = vpack.c.bf16 %v2046, %v2045
        %v2082 = vpack.c.bf16 %v2048, %v2047
        %v2083 = vpack.c.bf16 %v2050, %v2049
        %v2084 = vpack.c.bf16 %v2052, %v2051
        %v2085 = vunpack.c.l.bf16 %v2053
        %v2086 = vunpack.c.h.bf16 %v2053
        %v2087 = vunpack.c.l.bf16 %v2054
        %v2088 = vunpack.c.h.bf16 %v2054
        %v2089 = vunpack.c.l.bf16 %v2055
        %v2090 = vunpack.c.h.bf16 %v2055
        %v2091 = vunpack.c.l.bf16 %v2056
        %v2092 = vunpack.c.h.bf16 %v2056
        %v2093 = vunpack.c.l.bf16 %v2057
        %v2094 = vunpack.c.h.bf16 %v2057
        %v2095 = vunpack.c.l.bf16 %v2058
        %v2096 = vunpack.c.h.bf16 %v2058
        %v2097 = vunpack.c.l.bf16 %v2059
        %v2098 = vunpack.c.h.bf16 %v2059
        %v2099 = vunpack.c.l.bf16 %v2060
        %v2100 = vunpack.c.h.bf16 %v2060
        %v2101 = vunpack.c.l.bf16 %v2061
        %v2102 = vunpack.c.h.bf16 %v2061
        %v2103 = vunpack.c.l.bf16 %v2062
        %v2104 = vunpack.c.h.bf16 %v2062
        %v2105 = vunpack.c.l.bf16 %v2063
        %v2106 = vunpack.c.h.bf16 %v2063
        %v2107 = vunpack.c.l.bf16 %v2064
        %v2108 = vunpack.c.h.bf16 %v2064
        %v2109 = vunpack.c.l.bf16 %v2065
        %v2110 = vunpack.c.h.bf16 %v2065
        %v2111 = vunpack.c.l.bf16 %v2066
        %v2112 = vunpack.c.h.bf16 %v2066
        %v2113 = vunpack.c.l.bf16 %v2067
        %v2114 = vunpack.c.h.bf16 %v2067
        %v2115 = vunpack.c.l.bf16 %v2068
        %v2116 = vunpack.c.h.bf16 %v2068
        %v2117 = vunpack.c.l.bf16 %v2069
        %v2118 = vunpack.c.h.bf16 %v2069
        %v2119 = vunpack.c.l.bf16 %v2070
        %v2120 = vunpack.c.h.bf16 %v2070
        %v2121 = vunpack.c.l.bf16 %v2071
        %v2122 = vunpack.c.h.bf16 %v2071
        %v2123 = vunpack.c.l.bf16 %v2072
        %v2124 = vunpack.c.h.bf16 %v2072
        %v2125 = vunpack.c.l.bf16 %v2073
        %v2126 = vunpack.c.h.bf16 %v2073
        %v2127 = vunpack.c.l.bf16 %v2074
        %v2128 = vunpack.c.h.bf16 %v2074
        %v2129 = vunpack.c.l.bf16 %v2075
        %v2130 = vunpack.c.h.bf16 %v2075
        %v2131 = vunpack.c.l.bf16 %v2076
        %v2132 = vunpack.c.h.bf16 %v2076
        %v2133 = vunpack.c.l.bf16 %v2077
        %v2134 = vunpack.c.h.bf16 %v2077
        %v2135 = vunpack.c.l.bf16 %v2078
        %v2136 = vunpack.c.h.bf16 %v2078
        %v2137 = vunpack.c.l.bf16 %v2079
        %v2138 = vunpack.c.h.bf16 %v2079
        %v2139 = vunpack.c.l.bf16 %v2080
        %v2140 = vunpack.c.h.bf16 %v2080
        %v2141 = vunpack.c.l.bf16 %v2081
        %v2142 = vunpack.c.h.bf16 %v2081
        %v2143 = vunpack.c.l.bf16 %v2082
        %v2144 = vunpack.c.h.bf16 %v2082
        %v2145 = vunpack.c.l.bf16 %v2083
        %v2146 = vunpack.c.h.bf16 %v2083
        %v2147 = vunpack.c.l.bf16 %v2084
        %v2148 = vunpack.c.h.bf16 %v2084
        %vm2149 = vcmp.gt.f32.partialorder %v2085, 0.0
        %vm2150 = vcmp.gt.f32.partialorder %v2086, 0.0
        %vm2151 = vcmp.gt.f32.partialorder %v2087, 0.0
        %vm2152 = vcmp.gt.f32.partialorder %v2088, 0.0
        %vm2153 = vcmp.gt.f32.partialorder %v2089, 0.0
        %vm2154 = vcmp.gt.f32.partialorder %v2090, 0.0
        %vm2155 = vcmp.gt.f32.partialorder %v2091, 0.0
        %vm2156 = vcmp.gt.f32.partialorder %v2092, 0.0
        %vm2157 = vcmp.gt.f32.partialorder %v2093, 0.0
        %vm2158 = vcmp.gt.f32.partialorder %v2094, 0.0
        %vm2159 = vcmp.gt.f32.partialorder %v2095, 0.0
        %vm2160 = vcmp.gt.f32.partialorder %v2096, 0.0
        %vm2161 = vcmp.gt.f32.partialorder %v2097, 0.0
        %vm2162 = vcmp.gt.f32.partialorder %v2098, 0.0
        %vm2163 = vcmp.gt.f32.partialorder %v2099, 0.0
        %vm2164 = vcmp.gt.f32.partialorder %v2100, 0.0
        %vm2165 = vcmp.gt.f32.partialorder %v2101, 0.0
        %vm2166 = vcmp.gt.f32.partialorder %v2102, 0.0
        %vm2167 = vcmp.gt.f32.partialorder %v2103, 0.0
        %vm2168 = vcmp.gt.f32.partialorder %v2104, 0.0
        %vm2169 = vcmp.gt.f32.partialorder %v2105, 0.0
        %vm2170 = vcmp.gt.f32.partialorder %v2106, 0.0
        %vm2171 = vcmp.gt.f32.partialorder %v2107, 0.0
        %vm2172 = vcmp.gt.f32.partialorder %v2108, 0.0
        %vm2173 = vcmp.gt.f32.partialorder %v2109, 0.0
        %vm2174 = vcmp.gt.f32.partialorder %v2110, 0.0
        %vm2175 = vcmp.gt.f32.partialorder %v2111, 0.0
        %vm2176 = vcmp.gt.f32.partialorder %v2112, 0.0
        %vm2177 = vcmp.gt.f32.partialorder %v2113, 0.0
        %vm2178 = vcmp.gt.f32.partialorder %v2114, 0.0
        %vm2179 = vcmp.gt.f32.partialorder %v2115, 0.0
        %vm2180 = vcmp.gt.f32.partialorder %v2116, 0.0
        %vm2181 = vcmp.gt.f32.partialorder %v2117, 0.0
        %vm2182 = vcmp.gt.f32.partialorder %v2118, 0.0
        %vm2183 = vcmp.gt.f32.partialorder %v2119, 0.0
        %vm2184 = vcmp.gt.f32.partialorder %v2120, 0.0
        %vm2185 = vcmp.gt.f32.partialorder %v2121, 0.0
        %vm2186 = vcmp.gt.f32.partialorder %v2122, 0.0
        %vm2187 = vcmp.gt.f32.partialorder %v2123, 0.0
        %vm2188 = vcmp.gt.f32.partialorder %v2124, 0.0
        %vm2189 = vcmp.gt.f32.partialorder %v2125, 0.0
        %vm2190 = vcmp.gt.f32.partialorder %v2126, 0.0
        %vm2191 = vcmp.gt.f32.partialorder %v2127, 0.0
        %vm2192 = vcmp.gt.f32.partialorder %v2128, 0.0
        %vm2193 = vcmp.gt.f32.partialorder %v2129, 0.0
        %vm2194 = vcmp.gt.f32.partialorder %v2130, 0.0
        %vm2195 = vcmp.gt.f32.partialorder %v2131, 0.0
        %vm2196 = vcmp.gt.f32.partialorder %v2132, 0.0
        %vm2197 = vcmp.gt.f32.partialorder %v2133, 0.0
        %vm2198 = vcmp.gt.f32.partialorder %v2134, 0.0
        %vm2199 = vcmp.gt.f32.partialorder %v2135, 0.0
        %vm2200 = vcmp.gt.f32.partialorder %v2136, 0.0
        %vm2201 = vcmp.gt.f32.partialorder %v2137, 0.0
        %vm2202 = vcmp.gt.f32.partialorder %v2138, 0.0
        %vm2203 = vcmp.gt.f32.partialorder %v2139, 0.0
        %vm2204 = vcmp.gt.f32.partialorder %v2140, 0.0
        %vm2205 = vcmp.gt.f32.partialorder %v2141, 0.0
        %vm2206 = vcmp.gt.f32.partialorder %v2142, 0.0
        %vm2207 = vcmp.gt.f32.partialorder %v2143, 0.0
        %vm2208 = vcmp.gt.f32.partialorder %v2144, 0.0
        %vm2209 = vcmp.gt.f32.partialorder %v2145, 0.0
        %vm2210 = vcmp.gt.f32.partialorder %v2146, 0.0
        %vm2211 = vcmp.gt.f32.partialorder %v2147, 0.0
        %vm2212 = vcmp.gt.f32.partialorder %v2148, 0.0
        %v2213 = vmul.f32 %v2085, 0.20019531
        %v2214 = vmul.f32 %v2086, 0.20019531
        %v2215 = vmul.f32 %v2087, 0.20019531
        %v2216 = vmul.f32 %v2088, 0.20019531
        %v2217 = vmul.f32 %v2089, 0.20019531
        %v2218 = vmul.f32 %v2090, 0.20019531
        %v2219 = vmul.f32 %v2091, 0.20019531
        %v2220 = vmul.f32 %v2092, 0.20019531
        %v2221 = vmul.f32 %v2093, 0.20019531
        %v2222 = vmul.f32 %v2094, 0.20019531
        %v2223 = vmul.f32 %v2095, 0.20019531
        %v2224 = vmul.f32 %v2096, 0.20019531
        %v2225 = vmul.f32 %v2097, 0.20019531
        %v2226 = vmul.f32 %v2098, 0.20019531
        %v2227 = vmul.f32 %v2099, 0.20019531
        %v2228 = vmul.f32 %v2100, 0.20019531
        %v2229 = vmul.f32 %v2101, 0.20019531
        %v2230 = vmul.f32 %v2102, 0.20019531
        %v2231 = vmul.f32 %v2103, 0.20019531
        %v2232 = vmul.f32 %v2104, 0.20019531
        %v2233 = vmul.f32 %v2105, 0.20019531
        %v2234 = vmul.f32 %v2106, 0.20019531
        %v2235 = vmul.f32 %v2107, 0.20019531
        %v2236 = vmul.f32 %v2108, 0.20019531
        %v2237 = vmul.f32 %v2109, 0.20019531
        %v2238 = vmul.f32 %v2110, 0.20019531
        %v2239 = vmul.f32 %v2111, 0.20019531
        %v2240 = vmul.f32 %v2112, 0.20019531
        %v2241 = vmul.f32 %v2113, 0.20019531
        %v2242 = vmul.f32 %v2114, 0.20019531
        %v2243 = vmul.f32 %v2115, 0.20019531
        %v2244 = vmul.f32 %v2116, 0.20019531
        %v2245 = vmul.f32 %v2117, 0.20019531
        %v2246 = vmul.f32 %v2118, 0.20019531
        %v2247 = vmul.f32 %v2119, 0.20019531
        %v2248 = vmul.f32 %v2120, 0.20019531
        %v2249 = vmul.f32 %v2121, 0.20019531
        %v2250 = vmul.f32 %v2122, 0.20019531
        %v2251 = vmul.f32 %v2123, 0.20019531
        %v2252 = vmul.f32 %v2124, 0.20019531
        %v2253 = vmul.f32 %v2125, 0.20019531
        %v2254 = vmul.f32 %v2126, 0.20019531
        %v2255 = vmul.f32 %v2127, 0.20019531
        %v2256 = vmul.f32 %v2128, 0.20019531
        %v2257 = vmul.f32 %v2129, 0.20019531
        %v2258 = vmul.f32 %v2130, 0.20019531
        %v2259 = vmul.f32 %v2131, 0.20019531
        %v2260 = vmul.f32 %v2132, 0.20019531
        %v2261 = vmul.f32 %v2133, 0.20019531
        %v2262 = vmul.f32 %v2134, 0.20019531
        %v2263 = vmul.f32 %v2135, 0.20019531
        %v2264 = vmul.f32 %v2136, 0.20019531
        %v2265 = vmul.f32 %v2137, 0.20019531
        %v2266 = vmul.f32 %v2138, 0.20019531
        %v2267 = vmul.f32 %v2139, 0.20019531
        %v2268 = vmul.f32 %v2140, 0.20019531
        %v2269 = vmul.f32 %v2141, 0.20019531
        %v2270 = vmul.f32 %v2142, 0.20019531
        %v2271 = vmul.f32 %v2143, 0.20019531
        %v2272 = vmul.f32 %v2144, 0.20019531
        %v2273 = vmul.f32 %v2145, 0.20019531
        %v2274 = vmul.f32 %v2146, 0.20019531
        %v2275 = vmul.f32 %v2147, 0.20019531
        %v2276 = vmul.f32 %v2148, 0.20019531
        %v2277 = vpack.c.bf16 %v2214, %v2213
        %v2278 = vpack.c.bf16 %v2216, %v2215
        %v2279 = vpack.c.bf16 %v2218, %v2217
        %v2280 = vpack.c.bf16 %v2220, %v2219
        %v2281 = vpack.c.bf16 %v2222, %v2221
        %v2282 = vpack.c.bf16 %v2224, %v2223
        %v2283 = vpack.c.bf16 %v2226, %v2225
        %v2284 = vpack.c.bf16 %v2228, %v2227
        %v2285 = vpack.c.bf16 %v2230, %v2229
        %v2286 = vpack.c.bf16 %v2232, %v2231
        %v2287 = vpack.c.bf16 %v2234, %v2233
        %v2288 = vpack.c.bf16 %v2236, %v2235
        %v2289 = vpack.c.bf16 %v2238, %v2237
        %v2290 = vpack.c.bf16 %v2240, %v2239
        %v2291 = vpack.c.bf16 %v2242, %v2241
        %v2292 = vpack.c.bf16 %v2244, %v2243
        %v2293 = vpack.c.bf16 %v2246, %v2245
        %v2294 = vpack.c.bf16 %v2248, %v2247
        %v2295 = vpack.c.bf16 %v2250, %v2249
        %v2296 = vpack.c.bf16 %v2252, %v2251
        %v2297 = vpack.c.bf16 %v2254, %v2253
        %v2298 = vpack.c.bf16 %v2256, %v2255
        %v2299 = vpack.c.bf16 %v2258, %v2257
        %v2300 = vpack.c.bf16 %v2260, %v2259
        %v2301 = vpack.c.bf16 %v2262, %v2261
        %v2302 = vpack.c.bf16 %v2264, %v2263
        %v2303 = vpack.c.bf16 %v2266, %v2265
        %v2304 = vpack.c.bf16 %v2268, %v2267
        %v2305 = vpack.c.bf16 %v2270, %v2269
        %v2306 = vpack.c.bf16 %v2272, %v2271
        %v2307 = vpack.c.bf16 %v2274, %v2273
        %v2308 = vpack.c.bf16 %v2276, %v2275
        %vm2309 = vmpackc.low %vm2150, %vm2149
        %vm2310 = vmpackc.low %vm2152, %vm2151
        %vm2311 = vmpackc.low %vm2154, %vm2153
        %vm2312 = vmpackc.low %vm2156, %vm2155
        %vm2313 = vmpackc.low %vm2158, %vm2157
        %vm2314 = vmpackc.low %vm2160, %vm2159
        %vm2315 = vmpackc.low %vm2162, %vm2161
        %vm2316 = vmpackc.low %vm2164, %vm2163
        %vm2317 = vmpackc.low %vm2166, %vm2165
        %vm2318 = vmpackc.low %vm2168, %vm2167
        %vm2319 = vmpackc.low %vm2170, %vm2169
        %vm2320 = vmpackc.low %vm2172, %vm2171
        %vm2321 = vmpackc.low %vm2174, %vm2173
        %vm2322 = vmpackc.low %vm2176, %vm2175
        %vm2323 = vmpackc.low %vm2178, %vm2177
        %vm2324 = vmpackc.low %vm2180, %vm2179
        %vm2325 = vmpackc.low %vm2182, %vm2181
        %vm2326 = vmpackc.low %vm2184, %vm2183
        %vm2327 = vmpackc.low %vm2186, %vm2185
        %vm2328 = vmpackc.low %vm2188, %vm2187
        %vm2329 = vmpackc.low %vm2190, %vm2189
        %vm2330 = vmpackc.low %vm2192, %vm2191
        %vm2331 = vmpackc.low %vm2194, %vm2193
        %vm2332 = vmpackc.low %vm2196, %vm2195
        %vm2333 = vmpackc.low %vm2198, %vm2197
        %vm2334 = vmpackc.low %vm2200, %vm2199
        %vm2335 = vmpackc.low %vm2202, %vm2201
        %vm2336 = vmpackc.low %vm2204, %vm2203
        %vm2337 = vmpackc.low %vm2206, %vm2205
        %vm2338 = vmpackc.low %vm2208, %vm2207
        %vm2339 = vmpackc.low %vm2210, %vm2209
        %vm2340 = vmpackc.low %vm2212, %vm2211
        %v2341 = vsel %vm2309, %v2053, %v2277
        %v2342 = vsel %vm2310, %v2054, %v2278
        %v2343 = vsel %vm2311, %v2055, %v2279
        %v2344 = vsel %vm2312, %v2056, %v2280
        %v2345 = vsel %vm2313, %v2057, %v2281
        %v2346 = vsel %vm2314, %v2058, %v2282
        %v2347 = vsel %vm2315, %v2059, %v2283
        %v2348 = vsel %vm2316, %v2060, %v2284
        %v2349 = vsel %vm2317, %v2061, %v2285
        %v2350 = vsel %vm2318, %v2062, %v2286
        %v2351 = vsel %vm2319, %v2063, %v2287
        %v2352 = vsel %vm2320, %v2064, %v2288
        %v2353 = vsel %vm2321, %v2065, %v2289
        %v2354 = vsel %vm2322, %v2066, %v2290
        %v2355 = vsel %vm2323, %v2067, %v2291
        %v2356 = vsel %vm2324, %v2068, %v2292
        %v2357 = vsel %vm2325, %v2069, %v2293
        %v2358 = vsel %vm2326, %v2070, %v2294
        %v2359 = vsel %vm2327, %v2071, %v2295
        %v2360 = vsel %vm2328, %v2072, %v2296
        %v2361 = vsel %vm2329, %v2073, %v2297
        %v2362 = vsel %vm2330, %v2074, %v2298
        %v2363 = vsel %vm2331, %v2075, %v2299
        %v2364 = vsel %vm2332, %v2076, %v2300
        %v2365 = vsel %vm2333, %v2077, %v2301
        %v2366 = vsel %vm2334, %v2078, %v2302
        %v2367 = vsel %vm2335, %v2079, %v2303
        %v2368 = vsel %vm2336, %v2080, %v2304
        %v2369 = vsel %vm2337, %v2081, %v2305
        %v2370 = vsel %vm2338, %v2082, %v2306
        %v2371 = vsel %vm2339, %v2083, %v2307
        %v2372 = vsel %vm2340, %v2084, %v2308
        %v2373 = vld [vmem:[%s5] sm:$0x1]
        %v2374 = vld [vmem:[#allocation2] sm:$0x1]
        %2376 = vset.pattern.permute.xlu0 0
        %2377 = vperm.xlu0 %2376, %v2374
        %v2378 = vpop.permute.xlu0 %2377
        %v2380 = vperm.slane %v2378, 0
        %v2413 = vunpack.c.l.b16 %v2341
        %v2414 = vunpack.c.h.b16 %v2341
        %v2415 = vunpack.c.l.b16 %v2342
        %v2416 = vunpack.c.h.b16 %v2342
        %v2417 = vunpack.c.l.b16 %v2343
        %v2418 = vunpack.c.h.b16 %v2343
        %v2419 = vunpack.c.l.b16 %v2344
        %v2420 = vunpack.c.h.b16 %v2344
        %v2421 = vunpack.c.l.b16 %v2345
        %v2422 = vunpack.c.h.b16 %v2345
        %v2423 = vunpack.c.l.b16 %v2346
        %v2424 = vunpack.c.h.b16 %v2346
        %v2425 = vunpack.c.l.b16 %v2347
        %v2426 = vunpack.c.h.b16 %v2347
        %v2427 = vunpack.c.l.b16 %v2348
        %v2428 = vunpack.c.h.b16 %v2348
        %v2429 = vunpack.c.l.b16 %v2349
        %v2430 = vunpack.c.h.b16 %v2349
        %v2431 = vunpack.c.l.b16 %v2350
        %v2432 = vunpack.c.h.b16 %v2350
        %v2433 = vunpack.c.l.b16 %v2351
        %v2434 = vunpack.c.h.b16 %v2351
        %v2435 = vunpack.c.l.b16 %v2352
        %v2436 = vunpack.c.h.b16 %v2352
        %v2437 = vunpack.c.l.b16 %v2353
        %v2438 = vunpack.c.h.b16 %v2353
        %v2439 = vunpack.c.l.b16 %v2354
        %v2440 = vunpack.c.h.b16 %v2354
        %v2441 = vunpack.c.l.b16 %v2355
        %v2442 = vunpack.c.h.b16 %v2355
        %v2443 = vunpack.c.l.b16 %v2356
        %v2444 = vunpack.c.h.b16 %v2356
        %v2445 = vunpack.c.l.b16 %v2357
        %v2446 = vunpack.c.h.b16 %v2357
        %v2447 = vunpack.c.l.b16 %v2358
        %v2448 = vunpack.c.h.b16 %v2358
        %v2449 = vunpack.c.l.b16 %v2359
        %v2450 = vunpack.c.h.b16 %v2359
        %v2451 = vunpack.c.l.b16 %v2360
        %v2452 = vunpack.c.h.b16 %v2360
        %v2453 = vunpack.c.l.b16 %v2361
        %v2454 = vunpack.c.h.b16 %v2361
        %v2455 = vunpack.c.l.b16 %v2362
        %v2456 = vunpack.c.h.b16 %v2362
        %v2457 = vunpack.c.l.b16 %v2363
        %v2458 = vunpack.c.h.b16 %v2363
        %v2459 = vunpack.c.l.b16 %v2364
        %v2460 = vunpack.c.h.b16 %v2364
        %v2461 = vunpack.c.l.b16 %v2365
        %v2462 = vunpack.c.h.b16 %v2365
        %v2463 = vunpack.c.l.b16 %v2366
        %v2464 = vunpack.c.h.b16 %v2366
        %v2465 = vunpack.c.l.b16 %v2367
        %v2466 = vunpack.c.h.b16 %v2367
        %v2467 = vunpack.c.l.b16 %v2368
        %v2468 = vunpack.c.h.b16 %v2368
        %v2469 = vunpack.c.l.b16 %v2369
        %v2470 = vunpack.c.h.b16 %v2369
        %v2471 = vunpack.c.l.b16 %v2370
        %v2472 = vunpack.c.h.b16 %v2370
        %v2473 = vunpack.c.l.b16 %v2371
        %v2474 = vunpack.c.h.b16 %v2371
        %v2475 = vunpack.c.l.b16 %v2372
        %v2476 = vunpack.c.h.b16 %v2372
        %v2477 = vpack.c.b16 %v2417, %v2413
        %v2478 = vpack.c.b16 %v2418, %v2414
        %v2479 = vpack.c.b16 %v2419, %v2415
        %v2480 = vpack.c.b16 %v2420, %v2416
        %v2481 = vpack.c.b16 %v2425, %v2421
        %v2482 = vpack.c.b16 %v2426, %v2422
        %v2483 = vpack.c.b16 %v2427, %v2423
        %v2484 = vpack.c.b16 %v2428, %v2424
        %v2485 = vpack.c.b16 %v2433, %v2429
        %v2486 = vpack.c.b16 %v2434, %v2430
        %v2487 = vpack.c.b16 %v2435, %v2431
        %v2488 = vpack.c.b16 %v2436, %v2432
        %v2489 = vpack.c.b16 %v2441, %v2437
        %v2490 = vpack.c.b16 %v2442, %v2438
        %v2491 = vpack.c.b16 %v2443, %v2439
        %v2492 = vpack.c.b16 %v2444, %v2440
        %v2493 = vpack.c.b16 %v2449, %v2445
        %v2494 = vpack.c.b16 %v2450, %v2446
        %v2495 = vpack.c.b16 %v2451, %v2447
        %v2496 = vpack.c.b16 %v2452, %v2448
        %v2497 = vpack.c.b16 %v2457, %v2453
        %v2498 = vpack.c.b16 %v2458, %v2454
        %v2499 = vpack.c.b16 %v2459, %v2455
        %v2500 = vpack.c.b16 %v2460, %v2456
        %v2501 = vpack.c.b16 %v2465, %v2461
        %v2502 = vpack.c.b16 %v2466, %v2462
        %v2503 = vpack.c.b16 %v2467, %v2463
        %v2504 = vpack.c.b16 %v2468, %v2464
        %v2505 = vpack.c.b16 %v2473, %v2469
        %v2506 = vpack.c.b16 %v2474, %v2470
        %v2507 = vpack.c.b16 %v2475, %v2471
        %v2508 = vpack.c.b16 %v2476, %v2472
        %2541 = vmatpush.bf16.msra.mxu0 %v2505
        %2542 = vmatpush.bf16.msra.mxu0 %v2501
        %2543 = vmatpush.bf16.msra.mxu0 %v2497
        %2544 = vmatpush.bf16.msra.mxu0 %v2493
        %2545 = vmatpush.bf16.msra.mxu0 %v2489
        %2546 = vmatpush.bf16.msra.mxu0 %v2485
        %2547 = vmatpush.bf16.msra.mxu0 %v2481
        %2548 = vmatpush.bf16.msra.mxu0 %v2477
        %2549 = vmatmul.bf16.gmra.mxu0 %v2373
        %v2550 = vpop.f32.mrf.mxu0
        %v2551 = vadd.f32 %v2380, %v2550
        %v2552 = vpop.f32.mrf.mxu0
        %2553 = vdwg.mxu0
        %2554 = vmatpush.bf16.msra.mxu0 %v2506
        %2555 = vmatpush.bf16.msra.mxu0 %v2502
        %2556 = vmatpush.bf16.msra.mxu0 %v2498
        %2557 = vmatpush.bf16.msra.mxu0 %v2494
        %2558 = vmatpush.bf16.msra.mxu0 %v2490
        %2559 = vmatpush.bf16.msra.mxu0 %v2486
        %2560 = vmatpush.bf16.msra.mxu0 %v2482
        %2561 = vmatpush.bf16.msra.mxu0 %v2478
        %2562 = vmatmul.bf16.gmra.mxu0 %v2373
        %v2563 = vpop.f32.mrf.mxu0
        %v2564 = vadd.f32 %v2380, %v2563
        %v2565 = vpop.f32.mrf.mxu0
        %2566 = vdwg.mxu0
        %2567 = vmatpush.bf16.msra.mxu0 %v2507
        %2568 = vmatpush.bf16.msra.mxu0 %v2503
        %2569 = vmatpush.bf16.msra.mxu0 %v2499
        %2570 = vmatpush.bf16.msra.mxu0 %v2495
        %2571 = vmatpush.bf16.msra.mxu0 %v2491
        %2572 = vmatpush.bf16.msra.mxu0 %v2487
        %2573 = vmatpush.bf16.msra.mxu0 %v2483
        %2574 = vmatpush.bf16.msra.mxu0 %v2479
        %2575 = vmatmul.bf16.gmra.mxu0 %v2373
        %v2576 = vpop.f32.mrf.mxu0
        %v2577 = vadd.f32 %v2380, %v2576
        %v2578 = vpop.f32.mrf.mxu0
        %2579 = vdwg.mxu0
        %2580 = vmatpush.bf16.msra.mxu0 %v2508
        %2581 = vmatpush.bf16.msra.mxu0 %v2504
        %2582 = vmatpush.bf16.msra.mxu0 %v2500
        %2583 = vmatpush.bf16.msra.mxu0 %v2496
        %2584 = vmatpush.bf16.msra.mxu0 %v2492
        %2585 = vmatpush.bf16.msra.mxu0 %v2488
        %2586 = vmatpush.bf16.msra.mxu0 %v2484
        %2587 = vmatpush.bf16.msra.mxu0 %v2480
        %2588 = vmatmul.bf16.gmra.mxu0 %v2373
        %v2589 = vpop.f32.mrf.mxu0
        %v2590 = vadd.f32 %v2380, %v2589
        %v2591 = vpop.f32.mrf.mxu0
        %2592 = vdwg.mxu0
        %v2593 = vmul.f32 %v2551, 0.5
        %v2594 = vmul.f32 %v2564, 0.5
        %v2595 = vmul.f32 %v2577, 0.5
        %v2596 = vmul.f32 %v2590, 0.5
        %v2597 = vtanh.pop %v2593
        %v2598 = vtanh.pop %v2594
        %v2599 = vtanh.pop %v2595
        %v2600 = vtanh.pop %v2596
        %v2601 = vadd.f32 %v2597, 1.0
        %v2602 = vadd.f32 %v2598, 1.0
        %v2603 = vadd.f32 %v2599, 1.0
        %v2604 = vadd.f32 %v2600, 1.0
        %v2605 = vmul.f32 %v2601, 0.5
        %v2606 = vmul.f32 %v2602, 0.5
        %v2607 = vmul.f32 %v2603, 0.5
        %v2608 = vmul.f32 %v2604, 0.5
        %v2613 = vrot.slane %v2606, 7
        %v2614 = vrot.slane %v2607, 6
        %v2615 = vrot.slane %v2608, 5
        %vm2616 = vcmask 1040384
        %v2617 = vsel %vm2616, %v2605, %v2613
        %vm2618 = vcmask 1042434
        %v2619 = vsel %vm2618, %v2614, %v2615
        %vm2620 = vcmask 1041408
        %v2621 = vsel %vm2620, %v2617, %v2619
        %v2623 = vlaneseq
        %vm2624 = vcmp.ge.s32.totalorder %v2623, 0
        %vm2625 = vcmp.lt.s32.totalorder %v2623, 512
        %vm2626 = vmand %vm2624, %vm2625
        %2627 = vst.msk [vmem:[%s312] sm:$0xf] %vm2626, %v2621
        %s2628 = sand.u32 %s183, 1
        %s2629 = scalar_lea.sflag [#allocation5], %s2628
        %s2630 = sand.u32 %s183, 1
        %s2631 = smul.addr %s2630, 4
        %s2632 = scalar_lea.vmem [#allocation4], %s2631
        // Predicated region
        $region72: #{discriminator_forward.1} parent=66 // pred_check
          %p2633 = pneg %p193
        $region73: #{discriminator_forward.1} parent=66 // pred_check_branch
          %2635 = sbr.rel (%p2633) target = $region75
        $region74: #{discriminator_forward.1} parent=66 // pred_region
          %s2636 = smul.u32 4, %s23
          %2638 = vsyncadd %s2629, 0
          %s2639 = scalar_lea.hbm %s7, %s2636
          %s2641 = sshll.u32 %s2632, 4
          %s2642 = int_to_ptr.vmem [resolvable:$true] %s2641
          %s2643 = sshll.u32 %s2639, 4
          %s2644 = int_to_ptr.hbm [resolvable:$true] %s2643
          %2646 = dma.vmem_to_hbm [thread:$0]  %s2642, 64, %s2644, %s2629
        $region75: #{discriminator_forward.1} parent=66 // pred_fallthru
          _
      $region67: #{discriminator_forward.1} parent=5 // pred_fallthru
        _
      %p2647 = scmp.le.s32.totalorder 2, %s18
      // Predicated region
      $region76: #{discriminator_forward.1} parent=5 // pred_check
        %p2648 = pneg %p2647
      $region77: #{discriminator_forward.1} parent=5 // pred_check_branch
        %2650 = sbr.rel (%p2648) target = $region79
      $region78: #{discriminator_forward.1} parent=5 // pred_region
        %s2651 = ssub.s32 %s18, 2
        // Predicated region
        $region80: #{discriminator_forward.1} parent=78 // pred_check
          %p2652 = pneg %p199
        $region81: #{discriminator_forward.1} parent=78 // pred_check_branch
          %2654 = sbr.rel (%p2652) target = $region83
        $region82: #{discriminator_forward.1} parent=78 // pred_region
          %s2655 = sand.u32 %s184, 1
          %s2656 = scalar_lea.sflag [#allocation5], %s2655
          %s2657 = sand.u32 %s184, 1
          %s2658 = smul.addr %s2657, 4
          %s2659 = scalar_lea.vmem [#allocation4], %s2658
          %2661 = dma.done %s2656, 64
        $region83: #{discriminator_forward.1} parent=78 // pred_fallthru
          _
      $region79: #{discriminator_forward.1} parent=5 // pred_fallthru
        _
    $region6: #{discriminator_forward.1} parent=1 // loop_footer
      %s22 = sadd.s32 1, %s18
    $region7: #{discriminator_forward.1} parent=1 // loop_footer_branch
      %17 = sbr.rel target = $region3
    $region8: #{discriminator_forward.1} parent=1 // loop_exit
      _
    %2662 = vsyncpa [#allocation5], 1
    %s2663 = scalar_lea.sflag [#allocation5], 1
    %2664 = vsyncpa %s2663, 1

</llo_original>
